<compile_context>
chip_gen: v7x
topology: tpu7x:2x2x1
jax: 0.10.0
libtpu: 0.0.40
codegen_flags: <defaults>
</compile_context>

<pallas_src>
import functools

import numpy as np
import jax
import jax.numpy as jnp
from jax import lax
from jax.experimental import pallas as pl
from jax.experimental.pallas import tpu as pltpu


def _make_fp_kernel(num_layers, has_p1, matmul_dtype, approx_recip):
    """Kernel for a fixed layer count / skip-feature presence / MXU dtype."""

    def mxu(a, b):
        # (M, K) @ (K, N): MLP matmuls with (optionally bf16) operands, f32 accum.
        return jnp.dot(a.astype(matmul_dtype), b.astype(matmul_dtype),
                       preferred_element_type=jnp.float32)

    def mxu_t(w_t, x):
        # (C_out, K) x (TN, K) -> (C_out, TN): q@k^T-style contraction so the final
        # tile comes out channels-first (lane-dense store) without any relayout.
        return lax.dot_general(w_t.astype(matmul_dtype), x.astype(matmul_dtype),
                               (((1,), (1,)), ((), ())),
                               preferred_element_type=jnp.float32)

    def kernel(*refs):
        if has_p1:
            xyz1_ref, xyz2t_ref, p1_ref, p2_ref = refs[:4]
            wrefs = refs[4:-1]
        else:
            xyz1_ref, xyz2t_ref, p2_ref = refs[:3]
            p1_ref = None
            wrefs = refs[3:-1]
        out_ref = refs[-1]

        x1a = xyz1_ref[0]                                  # (TN, 8) pre-augmented
        x2t = xyz2t_ref[0]                                 # (8, S)  pre-augmented + T
        p2 = p2_ref[0]                                     # (S, D2)
        S = x2t.shape[1]

        # ---- squared distances: one plain f32 MXU matmul ----
        d = jnp.dot(x1a, x2t, preferred_element_type=jnp.float32)    # (TN, S)
        d = jnp.maximum(d, 0.0)      # cancellation insurance for near-duplicate points

        # ---- 3-NN (torch.sort lowest-index tie-break) + inverse-distance weights.
        # Unnormalized weights are accumulated in place; no one-hot float matrices.
        lane = lax.broadcasted_iota(jnp.int32, d.shape, 1)            # (TN, S)
        dcur = d
        wmat = jnp.zeros_like(d)                                      # (TN, S)
        norm = jnp.zeros((d.shape[0], 1), jnp.float32)                # (TN, 1)
        for _ in range(3):
            mins = jnp.min(dcur, axis=-1, keepdims=True)              # (TN, 1)
            first = jnp.min(jnp.where(dcur == mins, lane, S),
                            axis=-1, keepdims=True)                   # (TN, 1)
            sel = lane == first                                       # (TN, S) one-hot
            recip = pl.reciprocal(mins + 1e-8, approx=approx_recip)   # EUP slot
            wmat = jnp.where(sel, recip, wmat)
            norm = norm + recip
            dcur = jnp.where(sel, jnp.float32(jnp.inf), dcur)
        wmat = wmat * pl.reciprocal(norm, approx=approx_recip)        # (TN, S)

        # gather-free interpolation on the MXU; kept f32 so the weights stay exact.
        # TODO(synk): for very large S on v5e, chunk the 3-NN scan over S (running
        # top-3 state) so this dense (TN,S)@(S,D2) matmul does not scale with S.
        interp = jnp.dot(wmat, p2, preferred_element_type=jnp.float32)  # (TN, D2)

        # ---- MLP: Conv1d(k=1) + folded BN + ReLU; concat removed via split w0.
        # The LAST layer is computed channels-first so the store is lane-dense.
        if num_layers == 1:
            if has_p1:
                h_t = (mxu_t(wrefs[0][...], p1_ref[0])
                       + mxu_t(wrefs[1][...], interp) + wrefs[2][...])
            else:
                h_t = mxu_t(wrefs[0][...], interp) + wrefs[1][...]
        else:
            if has_p1:
                h = (mxu(p1_ref[0], wrefs[0][...])
                     + mxu(interp, wrefs[1][...]) + wrefs[2][...])
                idx = 3
            else:
                h = mxu(interp, wrefs[0][...]) + wrefs[1][...]
                idx = 2
            h = jnp.maximum(h, 0.0)
            for _ in range(num_layers - 2):
                w_ref, b_ref = wrefs[idx], wrefs[idx + 1]
                h = jnp.maximum(mxu(h, w_ref[...]) + b_ref[...], 0.0)
                idx += 2
            h_t = mxu_t(wrefs[idx][...], h) + wrefs[idx + 1][...]     # (C_out, TN)

        out_ref[0] = jnp.maximum(h_t, 0.0).astype(out_ref.dtype)

    return kernel


def _vmem_budget_bytes():
    """~75% of physical VMEM (v5e/v6e: 128 MiB, v7x: 64 MiB per TensorCore)."""
    cap = 64 << 20
    try:
        cap = int(getattr(pltpu.get_tpu_info(), "vmem_capacity_bytes", cap))
    except Exception:
        pass
    return int(cap * 0.75)


def _vmem_estimate(tn, s, d1, d2, c_max, weight_bytes):
    f32 = 4
    per_step = 2 * f32 * tn * (8 + d1 + c_max)      # double-buffered in/out tiles
    per_batch = 2 * f32 * s * (8 + d2)              # xyz2^T / points2 blocks
    temps = 5 * f32 * tn * s                        # d, dcur, lane iota, wmat + slack
    mlp = 2 * f32 * tn * c_max                      # live MLP intermediates
    return per_step + per_batch + temps + mlp + 2 * weight_bytes


def _pick_tile(n, b, s, d1, d2, c_max, weight_bytes, budget, target=512):
    """Largest 128-multiple divisor of n that fits the VMEM budget (128-multiples keep
    the (C_out, TN) output store lane-dense); keep >= 2 grid steps when possible so
    both v7x TensorCores get work."""
    cands = [t for t in range(128, min(n, target) + 1, 128) if n % t == 0]
    if not cands:
        return n                     # full-dim block, allowed by the (8,128) rule
    fits = [t for t in cands
            if _vmem_estimate(t, s, d1, d2, c_max, weight_bytes) <= budget]
    pool = fits if fits else cands[:1]
    multi = [t for t in pool if b * (n // t) >= 2]
    if multi:
        pool = multi
    return max(pool)


def fold_conv_bn(w, b, gamma, beta, mean, var, eps=1e-5):
    """Fold eval-mode BatchNorm1d into a Conv1d(k=1) weight (Cin, Cout) and bias."""
    scale = gamma / jnp.sqrt(var + eps)                    # (Cout,)
    w_f = w * scale[None, :]
    b_f = (b - mean) * scale + beta
    return w_f.astype(jnp.float32), b_f.reshape(1, -1).astype(jnp.float32)


def pointnet_fp_forward(xyz1, xyz2, points1, points2, layers, *, tile_n=None,
                        matmul_dtype=jnp.bfloat16):
    """PointNetFeaturePropagation forward (BN folded, eval mode).

    xyz1: (B, N, 3), xyz2: (B, S, 3), points1: (B, N, D1) or None, points2: (B, S, D2)
    layers: list of (w_folded (Cin, Cout), b_folded (1, Cout)) with BN pre-folded.
    Returns (B, C_last, N), matching the PyTorch module output layout.
    """
    B, N, _ = xyz1.shape
    S = xyz2.shape[1]

    xyz1 = xyz1.astype(jnp.float32)
    xyz2 = xyz2.astype(jnp.float32)
    points2 = points2.astype(jnp.float32)

    # S == 1: torch repeats the single point. Replicating it 3x makes the 3-NN path
    # return exactly that point (equal distances -> equal weights -> same point).
    if S == 1:
        xyz2 = jnp.tile(xyz2, (1, 3, 1))
        points2 = jnp.tile(points2, (1, 3, 1))
        S = 3
    D2 = points2.shape[-1]

    # Pre-augment xyz (one-time, tiny HBM cost) so the kernel's distance step is a
    # single plain (TN,8)@(8,S) matmul:
    #   d[n,s] = [x1, 1, ||x1||^2, 0..] . [-2*x2, ||x2||^2, 1, 0..]
    x1sq = jnp.sum(xyz1 * xyz1, axis=-1, keepdims=True)
    xyz1_aug = jnp.concatenate(
        [xyz1, jnp.ones((B, N, 1), jnp.float32), x1sq,
         jnp.zeros((B, N, 3), jnp.float32)], axis=-1)                  # (B, N, 8)
    x2sq = jnp.sum(xyz2 * xyz2, axis=-1, keepdims=True)
    xyz2_aug_t = jnp.transpose(jnp.concatenate(
        [-2.0 * xyz2, x2sq, jnp.ones((B, S, 1), jnp.float32),
         jnp.zeros((B, S, 3), jnp.float32)], axis=-1), (0, 2, 1))      # (B, 8, S)

    has_p1 = points1 is not None
    num_layers = len(layers)
    md = matmul_dtype
    w0, b0 = layers[0]
    weight_args = []
    if has_p1:
        points1 = points1.astype(md)             # MXU operand; cast once in HBM
        D1 = points1.shape[-1]
        w0a, w0b = w0[:D1], w0[D1:]              # cat order: [points1, interpolated]
    else:
        D1 = 0
    if num_layers == 1:
        # single layer == last layer: transposed weight(s), column bias
        if has_p1:
            weight_args += [w0a.T.astype(md), w0b.T.astype(md)]
        else:
            weight_args += [w0.T.astype(md)]
        weight_args += [b0.reshape(-1, 1).astype(jnp.float32)]
    else:
        if has_p1:
            weight_args += [w0a.astype(md), w0b.astype(md), b0.astype(jnp.float32)]
        else:
            weight_args += [w0.astype(md), b0.astype(jnp.float32)]
        for w, b in layers[1:-1]:
            weight_args += [w.astype(md), b.astype(jnp.float32)]
        w_l, b_l = layers[-1]
        weight_args += [w_l.T.astype(md), b_l.reshape(-1, 1).astype(jnp.float32)]

    C_out = layers[-1][0].shape[1]
    c_max = max(w.shape[1] for w, _ in layers)
    weight_bytes = sum(int(a.size) * 4 for a in weight_args)

    budget = _vmem_budget_bytes()
    if tile_n is None:
        TN = _pick_tile(N, B, S, D1, D2, c_max, weight_bytes, budget)
    else:
        TN = tile_n
        assert TN == N or TN % 128 == 0, "tile must be N or a multiple of 128"
    assert N % TN == 0, "N must be divisible by the row tile"

    def tiled(last):
        return pl.BlockSpec((1, TN, last), lambda b, n: (b, n, 0))

    def per_batch(shape):
        return pl.BlockSpec((1,) + shape, lambda b, n: (b, 0, 0))

    def full2d(arr):
        return pl.BlockSpec(arr.shape, lambda b, n: (0, 0))

    in_specs = [tiled(8), per_batch((8, S))]
    args = [xyz1_aug, xyz2_aug_t]
    if has_p1:
        in_specs.append(tiled(D1))
        args.append(points1)
    in_specs.append(per_batch((S, D2)))
    args.append(points2)
    in_specs += [full2d(a) for a in weight_args]
    args += weight_args
    # TODO(synk): on v7x, pipeline_mode=pl.Buffered(1) on the grid-invariant
    # xyz2/points2/weight blocks would skip their double-buffering and free VMEM.

    kernel = _make_fp_kernel(
        num_layers, has_p1, md,
        approx_recip=(np.dtype(md) != np.dtype(np.float32)))

    return pl.pallas_call(
        kernel,
        out_shape=jax.ShapeDtypeStruct((B, C_out, N), jnp.float32),
        grid=(B, N // TN),
        in_specs=in_specs,
        out_specs=pl.BlockSpec((1, C_out, TN), lambda b, n: (b, 0, n)),
        compiler_params=pltpu.CompilerParams(
            dimension_semantics=("parallel", "parallel"),
            vmem_limit_bytes=budget),
    )(*args)                                                # already (B, C_out, N)


def make_params(key, in_channel, mlp, eps=1e-5):
    """Deterministic synthetic Conv1d(k=1)+BN params, pre-folded for inference."""
    layers = []
    last = in_channel
    for i, c in enumerate(mlp):
        ks = jax.random.split(jax.random.fold_in(key, i), 6)
        w = 0.1 * jax.random.normal(ks[0], (last, c), jnp.float32)
        b = 0.1 * jax.random.normal(ks[1], (c,), jnp.float32)
        gamma = 1.0 + 0.1 * jax.random.normal(ks[2], (c,), jnp.float32)
        beta = 0.1 * jax.random.normal(ks[3], (c,), jnp.float32)
        mean = 0.1 * jax.random.normal(ks[4], (c,), jnp.float32)
        var = jax.random.uniform(ks[5], (c,), minval=0.5, maxval=1.5)
        layers.append(fold_conv_bn(w, b, gamma, beta, mean, var, eps))
        last = c
    return layers


def reference_forward(xyz1, xyz2, points1, points2, layers):
    """Pure-JAX reference mirroring the PyTorch forward (BN in eval mode)."""
    B, N, _ = xyz1.shape
    S = xyz2.shape[1]
    if S == 1:
        interp = jnp.tile(points2, (1, N, 1))
    else:
        d = (jnp.sum(xyz1 ** 2, -1)[:, :, None]
             + jnp.sum(xyz2 ** 2, -1)[:, None, :]
             - 2.0 * jnp.einsum("bnc,bsc->bns", xyz1, xyz2,
                                precision=jax.lax.Precision.HIGHEST))
        idx = jnp.argsort(d, axis=-1)[:, :, :3]                       # (B, N, 3)
        dsel = jnp.take_along_axis(d, idx, axis=-1)
        recip = 1.0 / (dsel + 1e-8)
        weight = recip / jnp.sum(recip, axis=-1, keepdims=True)
        gathered = jnp.take_along_axis(points2[:, None, :, :],
                                       idx[..., None], axis=2)        # (B, N, 3, D2)
        interp = jnp.sum(gathered * weight[..., None], axis=2)
    x = interp if points1 is None else jnp.concatenate([points1, interp], axis=-1)
    for w, b in layers:
        x = jnp.maximum(
            jnp.dot(x, w, precision=jax.lax.Precision.HIGHEST) + b, 0.0)
    return jnp.transpose(x, (0, 2, 1))


if __name__ == "__main__":
    B, N, S = 2, 128, 16
    D1, D2 = 16, 32
    MLP = [64, 32]

    key = jax.random.PRNGKey(0)
    k1, k2, k3, k4, kp = jax.random.split(key, 5)
    xyz1 = jax.random.normal(k1, (B, N, 3), jnp.float32)
    xyz2 = jax.random.normal(k2, (B, S, 3), jnp.float32)
    points1 = jax.random.normal(k3, (B, N, D1), jnp.float32)
    points2 = jax.random.normal(k4, (B, S, D2), jnp.float32)

    layers = make_params(kp, D1 + D2, MLP)
    layers_nop1 = make_params(jax.random.fold_in(kp, 7), D2, MLP)
    layers_single = make_params(jax.random.fold_in(kp, 11), D1 + D2, [32])

    fwd_f32 = jax.jit(functools.partial(pointnet_fp_forward,
                                        matmul_dtype=jnp.float32))
    fwd_bf16 = jax.jit(functools.partial(pointnet_fp_forward,
                                         matmul_dtype=jnp.bfloat16))

    # f32 MXU path: tight check against the f32 reference.
    out = jax.block_until_ready(fwd_f32(xyz1, xyz2, points1, points2, layers))
    ref = reference_forward(xyz1, xyz2, points1, points2, layers)
    assert out.shape == (B, MLP[-1], N)
    assert jnp.allclose(out, ref, rtol=1e-3, atol=1e-3), "f32 mismatch vs reference"

    # points1 is None -> kernel variant without the p1 operand.
    out_np1 = jax.block_until_ready(fwd_f32(xyz1, xyz2, None, points2, layers_nop1))
    ref_np1 = reference_forward(xyz1, xyz2, None, points2, layers_nop1)
    assert jnp.allclose(out_np1, ref_np1, rtol=1e-3, atol=1e-3), "no-points1 mismatch"

    # single-layer MLP (the transposed last layer coincides with the split first).
    out_1l = jax.block_until_ready(
        fwd_f32(xyz1, xyz2, points1, points2, layers_single))
    ref_1l = reference_forward(xyz1, xyz2, points1, points2, layers_single)
    assert jnp.allclose(out_1l, ref_1l, rtol=1e-3, atol=1e-3), "single-layer mismatch"

    # default bf16-operand MXU path (f32 accumulation): looser tolerance.
    out_bf = jax.block_until_ready(fwd_bf16(xyz1, xyz2, points1, points2, layers))
    assert jnp.allclose(out_bf, ref, rtol=5e-2, atol=5e-2), "bf16 mismatch vs reference"

    print("KERNEL_OK")
</pallas_src>

<mosaic_0001>
module attributes {stable_mosaic.version = 11 : i64} {
  func.func @kernel(%arg0: i32, %arg1: i32, %arg2: memref<1x128x8xf32, #tpu.memory_space<vmem>>, %arg3: memref<1x8x16xf32, #tpu.memory_space<vmem>>, %arg4: memref<1x128x16xf32, #tpu.memory_space<vmem>>, %arg5: memref<1x16x32xf32, #tpu.memory_space<vmem>>, %arg6: memref<16x64xf32, #tpu.memory_space<vmem>>, %arg7: memref<32x64xf32, #tpu.memory_space<vmem>>, %arg8: memref<1x64xf32, #tpu.memory_space<vmem>>, %arg9: memref<32x64xf32, #tpu.memory_space<vmem>>, %arg10: memref<32x1xf32, #tpu.memory_space<vmem>>, %arg11: memref<1x32x128xf32, #tpu.memory_space<vmem>>) attributes {dimension_semantics = [#tpu.dimension_semantics<parallel>, #tpu.dimension_semantics<parallel>], iteration_bounds = array<i64: 2, 1>, scalar_prefetch = 0 : i64, scratch_operands = 0 : i64, tpu.core_type = #tpu.core_type<tc>, window_params = [{transform_indices = @transform_0, window_bounds = array<i64: 1, 128, 8>}, {transform_indices = @transform_1, window_bounds = array<i64: 1, 8, 16>}, {transform_indices = @transform_2, window_bounds = array<i64: 1, 128, 16>}, {transform_indices = @transform_3, window_bounds = array<i64: 1, 16, 32>}, {pipeline_mode = #tpu.pipeline_mode<synchronous>, transform_indices = @transform_4, window_bounds = array<i64: 16, 64>}, {pipeline_mode = #tpu.pipeline_mode<synchronous>, transform_indices = @transform_5, window_bounds = array<i64: 32, 64>}, {pipeline_mode = #tpu.pipeline_mode<synchronous>, transform_indices = @transform_6, window_bounds = array<i64: 1, 64>}, {pipeline_mode = #tpu.pipeline_mode<synchronous>, transform_indices = @transform_7, window_bounds = array<i64: 32, 64>}, {pipeline_mode = #tpu.pipeline_mode<synchronous>, transform_indices = @transform_8, window_bounds = array<i64: 32, 1>}, {transform_indices = @transform_9, window_bounds = array<i64: 1, 32, 128>}]} {
    %c0 = arith.constant 0 : index
    %c0_0 = arith.constant 0 : index
    %c0_1 = arith.constant 0 : index
    %0 = vector.load %arg2[%c0, %c0_0, %c0_1] : memref<1x128x8xf32, #tpu.memory_space<vmem>>, vector<1x128x8xf32>
    %1 = vector.shape_cast %0 : vector<1x128x8xf32> to vector<128x8xf32>
    %c0_2 = arith.constant 0 : index
    %c0_3 = arith.constant 0 : index
    %c0_4 = arith.constant 0 : index
    %2 = vector.load %arg3[%c0_2, %c0_3, %c0_4] : memref<1x8x16xf32, #tpu.memory_space<vmem>>, vector<1x8x16xf32>
    %3 = vector.shape_cast %2 : vector<1x8x16xf32> to vector<8x16xf32>
    %c0_5 = arith.constant 0 : index
    %c0_6 = arith.constant 0 : index
    %c0_7 = arith.constant 0 : index
    %4 = vector.load %arg5[%c0_5, %c0_6, %c0_7] : memref<1x16x32xf32, #tpu.memory_space<vmem>>, vector<1x16x32xf32>
    %5 = vector.shape_cast %4 : vector<1x16x32xf32> to vector<16x32xf32>
    %cst = arith.constant dense<0.000000e+00> : vector<128x16xf32>
    %6 = tpu.matmul %1, %3, %cst {dimension_numbers = #tpu.dot_dimension_numbers<[1], [0], [0], [1], [0, 0, 1, 1], [], []>} : vector<128x8xf32>, vector<8x16xf32>, vector<128x16xf32> -> vector<128x16xf32>
    %cst_8 = arith.constant 0.000000e+00 : f32
    %7 = vector.broadcast %cst_8 : f32 to vector<128x16xf32>
    %8 = arith.maximumf %6, %7 : vector<128x16xf32>
    %9 = tpu.iota {dimensions = array<i32: 1>} : vector<128x16xi32>
    %cst_9 = arith.constant 0.000000e+00 : f32
    %10 = vector.broadcast %cst_9 : f32 to vector<128x16xf32>
    %cst_10 = arith.constant 0.000000e+00 : f32
    %11 = vector.broadcast %cst_10 : f32 to vector<128x1xf32>
    %cst_11 = arith.constant dense<0x7F800000> : vector<128xf32>
    %12 = vector.multi_reduction <minimumf>, %8, %cst_11 [1] : vector<128x16xf32> to vector<128xf32>
    %13 = vector.shape_cast %12 : vector<128xf32> to vector<128x1xf32>
    %14 = vector.broadcast %13 : vector<128x1xf32> to vector<128x16xf32>
    %15 = arith.cmpf oeq, %8, %14 : vector<128x16xf32>
    %c16_i32 = arith.constant 16 : i32
    %16 = vector.broadcast %c16_i32 : i32 to vector<128x16xi32>
    %17 = arith.select %15, %9, %16 : vector<128x16xi1>, vector<128x16xi32>
    %cst_12 = arith.constant dense<2147483647> : vector<128xi32>
    %18 = vector.multi_reduction <minsi>, %17, %cst_12 [1] : vector<128x16xi32> to vector<128xi32>
    %19 = vector.shape_cast %18 : vector<128xi32> to vector<128x1xi32>
    %20 = vector.broadcast %19 : vector<128x1xi32> to vector<128x16xi32>
    %21 = arith.cmpi eq, %9, %20 : vector<128x16xi32>
    %cst_13 = arith.constant 9.99999993E-9 : f32
    %22 = vector.broadcast %cst_13 : f32 to vector<128x1xf32>
    %23 = arith.addf %13, %22 : vector<128x1xf32>
    %24 = tpu.reciprocal %23 : vector<128x1xf32> -> vector<128x1xf32>
    %25 = vector.shape_cast %24 : vector<128x1xf32> to vector<128x1xf32>
    %26 = vector.broadcast %25 : vector<128x1xf32> to vector<128x16xf32>
    %27 = arith.select %21, %26, %10 : vector<128x16xi1>, vector<128x16xf32>
    %28 = arith.addf %11, %24 : vector<128x1xf32>
    %cst_14 = arith.constant 0x7F800000 : f32
    %29 = vector.broadcast %cst_14 : f32 to vector<128x16xf32>
    %30 = arith.select %21, %29, %8 : vector<128x16xi1>, vector<128x16xf32>
    %cst_15 = arith.constant dense<0x7F800000> : vector<128xf32>
    %31 = vector.multi_reduction <minimumf>, %30, %cst_15 [1] : vector<128x16xf32> to vector<128xf32>
    %32 = vector.shape_cast %31 : vector<128xf32> to vector<128x1xf32>
    %33 = vector.broadcast %32 : vector<128x1xf32> to vector<128x16xf32>
    %34 = arith.cmpf oeq, %30, %33 : vector<128x16xf32>
    %c16_i32_16 = arith.constant 16 : i32
    %35 = vector.broadcast %c16_i32_16 : i32 to vector<128x16xi32>
    %36 = arith.select %34, %9, %35 : vector<128x16xi1>, vector<128x16xi32>
    %cst_17 = arith.constant dense<2147483647> : vector<128xi32>
    %37 = vector.multi_reduction <minsi>, %36, %cst_17 [1] : vector<128x16xi32> to vector<128xi32>
    %38 = vector.shape_cast %37 : vector<128xi32> to vector<128x1xi32>
    %39 = vector.broadcast %38 : vector<128x1xi32> to vector<128x16xi32>
    %40 = arith.cmpi eq, %9, %39 : vector<128x16xi32>
    %cst_18 = arith.constant 9.99999993E-9 : f32
    %41 = vector.broadcast %cst_18 : f32 to vector<128x1xf32>
    %42 = arith.addf %32, %41 : vector<128x1xf32>
    %43 = tpu.reciprocal %42 : vector<128x1xf32> -> vector<128x1xf32>
    %44 = vector.shape_cast %43 : vector<128x1xf32> to vector<128x1xf32>
    %45 = vector.broadcast %44 : vector<128x1xf32> to vector<128x16xf32>
    %46 = arith.select %40, %45, %27 : vector<128x16xi1>, vector<128x16xf32>
    %47 = arith.addf %28, %43 : vector<128x1xf32>
    %cst_19 = arith.constant 0x7F800000 : f32
    %48 = vector.broadcast %cst_19 : f32 to vector<128x16xf32>
    %49 = arith.select %40, %48, %30 : vector<128x16xi1>, vector<128x16xf32>
    %cst_20 = arith.constant dense<0x7F800000> : vector<128xf32>
    %50 = vector.multi_reduction <minimumf>, %49, %cst_20 [1] : vector<128x16xf32> to vector<128xf32>
    %51 = vector.shape_cast %50 : vector<128xf32> to vector<128x1xf32>
    %52 = vector.broadcast %51 : vector<128x1xf32> to vector<128x16xf32>
    %53 = arith.cmpf oeq, %49, %52 : vector<128x16xf32>
    %c16_i32_21 = arith.constant 16 : i32
    %54 = vector.broadcast %c16_i32_21 : i32 to vector<128x16xi32>
    %55 = arith.select %53, %9, %54 : vector<128x16xi1>, vector<128x16xi32>
    %cst_22 = arith.constant dense<2147483647> : vector<128xi32>
    %56 = vector.multi_reduction <minsi>, %55, %cst_22 [1] : vector<128x16xi32> to vector<128xi32>
    %57 = vector.shape_cast %56 : vector<128xi32> to vector<128x1xi32>
    %58 = vector.broadcast %57 : vector<128x1xi32> to vector<128x16xi32>
    %59 = arith.cmpi eq, %9, %58 : vector<128x16xi32>
    %cst_23 = arith.constant 9.99999993E-9 : f32
    %60 = vector.broadcast %cst_23 : f32 to vector<128x1xf32>
    %61 = arith.addf %51, %60 : vector<128x1xf32>
    %62 = tpu.reciprocal %61 : vector<128x1xf32> -> vector<128x1xf32>
    %63 = vector.shape_cast %62 : vector<128x1xf32> to vector<128x1xf32>
    %64 = vector.broadcast %63 : vector<128x1xf32> to vector<128x16xf32>
    %65 = arith.select %59, %64, %46 : vector<128x16xi1>, vector<128x16xf32>
    %66 = arith.addf %47, %62 : vector<128x1xf32>
    %67 = tpu.reciprocal %66 : vector<128x1xf32> -> vector<128x1xf32>
    %68 = vector.broadcast %67 : vector<128x1xf32> to vector<128x16xf32>
    %69 = arith.mulf %65, %68 : vector<128x16xf32>
    %cst_24 = arith.constant dense<0.000000e+00> : vector<128x32xf32>
    %70 = tpu.matmul %69, %5, %cst_24 {dimension_numbers = #tpu.dot_dimension_numbers<[1], [0], [0], [1], [0, 0, 1, 1], [], []>} : vector<128x16xf32>, vector<16x32xf32>, vector<128x32xf32> -> vector<128x32xf32>
    %c0_25 = arith.constant 0 : index
    %c0_26 = arith.constant 0 : index
    %c0_27 = arith.constant 0 : index
    %71 = vector.load %arg4[%c0_25, %c0_26, %c0_27] : memref<1x128x16xf32, #tpu.memory_space<vmem>>, vector<1x128x16xf32>
    %72 = vector.shape_cast %71 : vector<1x128x16xf32> to vector<128x16xf32>
    %c0_28 = arith.constant 0 : index
    %c0_29 = arith.constant 0 : index
    %73 = vector.load %arg6[%c0_28, %c0_29] : memref<16x64xf32, #tpu.memory_space<vmem>>, vector<16x64xf32>
    %cst_30 = arith.constant dense<0.000000e+00> : vector<128x64xf32>
    %74 = tpu.matmul %72, %73, %cst_30 {dimension_numbers = #tpu.dot_dimension_numbers<[1], [0], [0], [1], [0, 0, 1, 1], [], []>} : vector<128x16xf32>, vector<16x64xf32>, vector<128x64xf32> -> vector<128x64xf32>
    %c0_31 = arith.constant 0 : index
    %c0_32 = arith.constant 0 : index
    %75 = vector.load %arg7[%c0_31, %c0_32] : memref<32x64xf32, #tpu.memory_space<vmem>>, vector<32x64xf32>
    %cst_33 = arith.constant dense<0.000000e+00> : vector<128x64xf32>
    %76 = tpu.matmul %70, %75, %cst_33 {dimension_numbers = #tpu.dot_dimension_numbers<[1], [0], [0], [1], [0, 0, 1, 1], [], []>} : vector<128x32xf32>, vector<32x64xf32>, vector<128x64xf32> -> vector<128x64xf32>
    %77 = arith.addf %74, %76 : vector<128x64xf32>
    %c0_34 = arith.constant 0 : index
    %c0_35 = arith.constant 0 : index
    %78 = vector.load %arg8[%c0_34, %c0_35] : memref<1x64xf32, #tpu.memory_space<vmem>>, vector<1x64xf32>
    %79 = vector.broadcast %78 : vector<1x64xf32> to vector<128x64xf32>
    %80 = arith.addf %77, %79 : vector<128x64xf32>
    %cst_36 = arith.constant 0.000000e+00 : f32
    %81 = vector.broadcast %cst_36 : f32 to vector<128x64xf32>
    %82 = arith.maximumf %80, %81 : vector<128x64xf32>
    %c0_37 = arith.constant 0 : index
    %c0_38 = arith.constant 0 : index
    %83 = vector.load %arg9[%c0_37, %c0_38] : memref<32x64xf32, #tpu.memory_space<vmem>>, vector<32x64xf32>
    %cst_39 = arith.constant dense<0.000000e+00> : vector<32x128xf32>
    %84 = tpu.matmul %83, %82, %cst_39 {dimension_numbers = #tpu.dot_dimension_numbers<[1], [1], [0], [0], [0, 0, 1, 0], [], []>} : vector<32x64xf32>, vector<128x64xf32>, vector<32x128xf32> -> vector<32x128xf32>
    %c0_40 = arith.constant 0 : index
    %c0_41 = arith.constant 0 : index
    %85 = vector.load %arg10[%c0_40, %c0_41] : memref<32x1xf32, #tpu.memory_space<vmem>>, vector<32x1xf32>
    %86 = vector.broadcast %85 : vector<32x1xf32> to vector<32x128xf32>
    %87 = arith.addf %84, %86 : vector<32x128xf32>
    %cst_42 = arith.constant 0.000000e+00 : f32
    %88 = vector.broadcast %cst_42 : f32 to vector<32x128xf32>
    %89 = arith.maximumf %87, %88 : vector<32x128xf32>
    %c0_43 = arith.constant 0 : index
    %c0_44 = arith.constant 0 : index
    %c0_45 = arith.constant 0 : index
    %90 = vector.load %arg11[%c0_43, %c0_44, %c0_45] : memref<1x32x128xf32, #tpu.memory_space<vmem>>, vector<1x32x128xf32>
    %91 = vector.shape_cast %90 : vector<1x32x128xf32> to vector<32x128xf32>
    %92 = vector.shape_cast %89 : vector<32x128xf32> to vector<1x32x128xf32>
    tpu.vector_store %arg11[%c0_43, %c0_44, %c0_45], %92 {strides = array<i32>} : memref<1x32x128xf32, #tpu.memory_space<vmem>>, vector<1x32x128xf32>,
    return
  }
  func.func @transform_0(%arg0: i32, %arg1: i32) -> (i32, i32, i32) {
    %c0_i32 = arith.constant 0 : i32
    %c0_i32_0 = arith.constant 0 : i32
    return %arg0, %arg1, %c0_i32 : i32, i32, i32
  }
  func.func @transform_1(%arg0: i32, %arg1: i32) -> (i32, i32, i32) {
    %c0_i32 = arith.constant 0 : i32
    %c0_i32_0 = arith.constant 0 : i32
    %c0_i32_1 = arith.constant 0 : i32
    return %arg0, %c0_i32, %c0_i32_0 : i32, i32, i32
  }
  func.func @transform_2(%arg0: i32, %arg1: i32) -> (i32, i32, i32) {
    %c0_i32 = arith.constant 0 : i32
    %c0_i32_0 = arith.constant 0 : i32
    return %arg0, %arg1, %c0_i32 : i32, i32, i32
  }
  func.func @transform_3(%arg0: i32, %arg1: i32) -> (i32, i32, i32) {
    %c0_i32 = arith.constant 0 : i32
    %c0_i32_0 = arith.constant 0 : i32
    %c0_i32_1 = arith.constant 0 : i32
    return %arg0, %c0_i32, %c0_i32_0 : i32, i32, i32
  }
  func.func @transform_4(%arg0: i32, %arg1: i32) -> (i32, i32) {
    %c0_i32 = arith.constant 0 : i32
    %c0_i32_0 = arith.constant 0 : i32
    %c0_i32_1 = arith.constant 0 : i32
    return %c0_i32, %c0_i32_0 : i32, i32
  }
  func.func @transform_5(%arg0: i32, %arg1: i32) -> (i32, i32) {
    %c0_i32 = arith.constant 0 : i32
    %c0_i32_0 = arith.constant 0 : i32
    %c0_i32_1 = arith.constant 0 : i32
    return %c0_i32, %c0_i32_0 : i32, i32
  }
  func.func @transform_6(%arg0: i32, %arg1: i32) -> (i32, i32) {
    %c0_i32 = arith.constant 0 : i32
    %c0_i32_0 = arith.constant 0 : i32
    %c0_i32_1 = arith.constant 0 : i32
    return %c0_i32, %c0_i32_0 : i32, i32
  }
  func.func @transform_7(%arg0: i32, %arg1: i32) -> (i32, i32) {
    %c0_i32 = arith.constant 0 : i32
    %c0_i32_0 = arith.constant 0 : i32
    %c0_i32_1 = arith.constant 0 : i32
    return %c0_i32, %c0_i32_0 : i32, i32
  }
  func.func @transform_8(%arg0: i32, %arg1: i32) -> (i32, i32) {
    %c0_i32 = arith.constant 0 : i32
    %c0_i32_0 = arith.constant 0 : i32
    %c0_i32_1 = arith.constant 0 : i32
    return %c0_i32, %c0_i32_0 : i32, i32
  }
  func.func @transform_9(%arg0: i32, %arg1: i32) -> (i32, i32, i32) {
    %c0_i32 = arith.constant 0 : i32
    %c0_i32_0 = arith.constant 0 : i32
    return %arg0, %c0_i32, %arg1 : i32, i32, i32
  }
}

</mosaic_0001>

<llo_original>
// kernel: pointnet_fp_forward.1
$region0: #{pointnet_fp_forward.1}
  #allocation0 [shape = 'u32[]', space=smem, size = 0x4, offset = 0x4, fixed_abs, tag = 'smem constant byte address 0x4 - core index']
  #allocation1 [shape = 'u32[144,128]{1,0:T(1,128)}', space=vmem, size = 0x12000, scoped, tag = 'internal scratch']
  %s0 = inlined_call_operand.vmem [shape: f32[2,128,8], index: 0, kind: input, shape index: {}]
  %s1 = inlined_call_operand.vmem [shape: f32[2,8,16], index: 1, kind: input, shape index: {}]
  %s2 = inlined_call_operand.vmem [shape: f32[2,128,16], index: 2, kind: input, shape index: {}]
  %s3 = inlined_call_operand.vmem [shape: f32[2,16,32], index: 3, kind: input, shape index: {}]
  %s4 = inlined_call_operand.vmem [shape: f32[16,64], index: 4, kind: input, shape index: {}]
  %s5 = inlined_call_operand.vmem [shape: f32[32,64], index: 5, kind: input, shape index: {}]
  %s6 = inlined_call_operand.vmem [shape: f32[1,64], index: 6, kind: input, shape index: {}]
  %s7 = inlined_call_operand.vmem [shape: f32[32,64], index: 7, kind: input, shape index: {}]
  %s8 = inlined_call_operand.vmem [shape: f32[32,1], index: 8, kind: input, shape index: {}]
  %s9 = inlined_call_operand.hbm [shape: f32[2,32,128], index: 9, kind: output, shape index: {}]
  %s10 = sld [smem:[#allocation0]]
  $region69: #{pointnet_fp_forward.1} parent=0
    _
  %s12 = ssub.s32 1, %s10
  %s13 = scalar_select 0, %s12, %s10
  $region1: #{pointnet_fp_forward.1} parent=0
    #allocation2 [shape = 'u8[32768]{0}', space=vmem, size = 0x8000, scoped, tag = 'output window, operand 0']
    #allocation3 [shape = 's32[2]{0}', space=sflag, size = 0x8, scoped, tag = 'scoped memory for pointnet_fp_forward.1']
    %14 = vsyncpa [#allocation3], 0
    %s15 = scalar_lea.sflag [#allocation3], 1
    %16 = vsyncpa %s15, 0
    loop: start=0, step=1, limit=4
    $region2: #{pointnet_fp_forward.1} parent=1 // loop_pre_header
      _
    $region3: #{pointnet_fp_forward.1} parent=1 // loop_header
      %s18 = sphi 0, %s22
      %p19 = scmp.ge.s32.totalorder %s18, 4
      %s25 = sphi 0, %s37
      %s26 = sphi 0, %s33
      %s27 = sphi 0, %s25
      %s28 = sphi 0, %s26
      %s29 = sphi 0, %s27
      %s30 = sphi 0, %s28
      %s42 = sphi 0, %s44
      %s45 = sphi 0, %s42
      %s46 = sphi 0, %s45
      %s62 = sphi 0, %s46
      %s68 = sphi 0, %s70
      %s71 = sphi 0, %s68
      %s72 = sphi 0, %s71
      %s88 = sphi 0, %s72
      %s96 = sphi 0, %s98
      %s99 = sphi 0, %s96
      %s100 = sphi 0, %s99
      %s116 = sphi 0, %s100
      %s122 = sphi 0, %s124
      %s125 = sphi 0, %s122
      %s126 = sphi 0, %s125
      %s142 = sphi 0, %s126
      %s146 = sphi 0, %s146
      %s148 = sphi 0, %s146
      %s149 = sphi 0, %s148
      %s163 = sphi 0, %s149
      %s167 = sphi 0, %s167
      %s169 = sphi 0, %s167
      %s170 = sphi 0, %s169
      %s184 = sphi 0, %s170
      %s188 = sphi 0, %s188
      %s190 = sphi 0, %s188
      %s191 = sphi 0, %s190
      %s205 = sphi 0, %s191
      %s209 = sphi 0, %s209
      %s211 = sphi 0, %s209
      %s212 = sphi 0, %s211
      %s226 = sphi 0, %s212
      %s230 = sphi 0, %s230
      %s232 = sphi 0, %s230
      %s233 = sphi 0, %s232
      %s247 = sphi 0, %s233
      %s255 = sphi 0, %s257
      %s258 = sphi 0, %s255
      %s259 = sphi 0, %s258
      %s275 = sphi 0, %s259
    $region4: #{pointnet_fp_forward.1} parent=1 // loop_header_branch
      %21 = sbr.rel (%p19) target = $region8
    $region5: #{pointnet_fp_forward.1} parent=1 // loop_body
      %s23 = ssub.s32 %s18, 1
      %s24 = ssub.s32 %s18, 2
      %s31 = sadd.s32 1, %s26
      %p32 = scmp.ge.s32.totalorder %s31, 1
      %s33 = scalar_select %p32, 0, %s31
      %s34 = sadd.s32 1, %s25
      %s35 = scalar_select %p32, %s34, %s25
      %p36 = scmp.ge.s32.totalorder %s35, 2
      %s37 = scalar_select %p36, 0, %s35
      %s38 = ssub.s32 %s25, %s37
      %s39 = ssub.s32 %s26, %s33
      %s40 = sor.u32 %s38, %s39
      %p41 = scmp.eq.s32.totalorder %s40, 0
      %s43 = sadd.s32 %s42, 1
      %s44 = scalar_select %p41, %s42, %s43
      %p47 = pneg %p41
      %p48 = scmp.eq.s32.totalorder %s18, 1
      %p49 = por %p47, %p48
      %p50 = scmp.ne.s32.totalorder %s42, %s45
      %p51 = scmp.eq.s32.totalorder %s18, 0
      %p52 = por %p50, %p51
      %p53 = scmp.ne.s32.totalorder %s42, %s45
      %p54 = scmp.eq.s32.totalorder %s23, 1
      %p55 = por %p53, %p54
      %p56 = scmp.ne.s32.totalorder %s45, %s46
      %p57 = scmp.eq.s32.totalorder %s23, 0
      %p58 = por %p56, %p57
      %p59 = scmp.ne.s32.totalorder %s45, %s46
      %p60 = scmp.eq.s32.totalorder %s24, 1
      %p61 = por %p59, %p60
      %p63 = scmp.ne.s32.totalorder %s46, %s62
      %p64 = scmp.eq.s32.totalorder %s24, 0
      %p65 = por %p63, %p64
      %s66 = ssub.s32 %s25, %s37
      %p67 = scmp.eq.s32.totalorder %s66, 0
      %s69 = sadd.s32 %s68, 1
      %s70 = scalar_select %p67, %s68, %s69
      %p73 = pneg %p67
      %p74 = scmp.eq.s32.totalorder %s18, 1
      %p75 = por %p73, %p74
      %p76 = scmp.ne.s32.totalorder %s68, %s71
      %p77 = scmp.eq.s32.totalorder %s18, 0
      %p78 = por %p76, %p77
      %p79 = scmp.ne.s32.totalorder %s68, %s71
      %p80 = scmp.eq.s32.totalorder %s23, 1
      %p81 = por %p79, %p80
      %p82 = scmp.ne.s32.totalorder %s71, %s72
      %p83 = scmp.eq.s32.totalorder %s23, 0
      %p84 = por %p82, %p83
      %p85 = scmp.ne.s32.totalorder %s71, %s72
      %p86 = scmp.eq.s32.totalorder %s24, 1
      %p87 = por %p85, %p86
      %p89 = scmp.ne.s32.totalorder %s72, %s88
      %p90 = scmp.eq.s32.totalorder %s24, 0
      %p91 = por %p89, %p90
      %s92 = ssub.s32 %s25, %s37
      %s93 = ssub.s32 %s26, %s33
      %s94 = sor.u32 %s92, %s93
      %p95 = scmp.eq.s32.totalorder %s94, 0
      %s97 = sadd.s32 %s96, 1
      %s98 = scalar_select %p95, %s96, %s97
      %p101 = pneg %p95
      %p102 = scmp.eq.s32.totalorder %s18, 1
      %p103 = por %p101, %p102
      %p104 = scmp.ne.s32.totalorder %s96, %s99
      %p105 = scmp.eq.s32.totalorder %s18, 0
      %p106 = por %p104, %p105
      %p107 = scmp.ne.s32.totalorder %s96, %s99
      %p108 = scmp.eq.s32.totalorder %s23, 1
      %p109 = por %p107, %p108
      %p110 = scmp.ne.s32.totalorder %s99, %s100
      %p111 = scmp.eq.s32.totalorder %s23, 0
      %p112 = por %p110, %p111
      %p113 = scmp.ne.s32.totalorder %s99, %s100
      %p114 = scmp.eq.s32.totalorder %s24, 1
      %p115 = por %p113, %p114
      %p117 = scmp.ne.s32.totalorder %s100, %s116
      %p118 = scmp.eq.s32.totalorder %s24, 0
      %p119 = por %p117, %p118
      %s120 = ssub.s32 %s25, %s37
      %p121 = scmp.eq.s32.totalorder %s120, 0
      %s123 = sadd.s32 %s122, 1
      %s124 = scalar_select %p121, %s122, %s123
      %p127 = pneg %p121
      %p128 = scmp.eq.s32.totalorder %s18, 1
      %p129 = por %p127, %p128
      %p130 = scmp.ne.s32.totalorder %s122, %s125
      %p131 = scmp.eq.s32.totalorder %s18, 0
      %p132 = por %p130, %p131
      %p133 = scmp.ne.s32.totalorder %s122, %s125
      %p134 = scmp.eq.s32.totalorder %s23, 1
      %p135 = por %p133, %p134
      %p136 = scmp.ne.s32.totalorder %s125, %s126
      %p137 = scmp.eq.s32.totalorder %s23, 0
      %p138 = por %p136, %p137
      %p139 = scmp.ne.s32.totalorder %s125, %s126
      %p140 = scmp.eq.s32.totalorder %s24, 1
      %p141 = por %p139, %p140
      %p143 = scmp.ne.s32.totalorder %s126, %s142
      %p144 = scmp.eq.s32.totalorder %s24, 0
      %p145 = por %p143, %p144
      %s147 = sadd.s32 %s146, 1
      %p150 = scmp.eq.s32.totalorder %s18, 1
      %p151 = scmp.ne.s32.totalorder %s146, %s148
      %p152 = scmp.eq.s32.totalorder %s18, 0
      %p153 = por %p151, %p152
      %p154 = scmp.ne.s32.totalorder %s146, %s148
      %p155 = scmp.eq.s32.totalorder %s23, 1
      %p156 = por %p154, %p155
      %p157 = scmp.ne.s32.totalorder %s148, %s149
      %p158 = scmp.eq.s32.totalorder %s23, 0
      %p159 = por %p157, %p158
      %p160 = scmp.ne.s32.totalorder %s148, %s149
      %p161 = scmp.eq.s32.totalorder %s24, 1
      %p162 = por %p160, %p161
      %p164 = scmp.ne.s32.totalorder %s149, %s163
      %p165 = scmp.eq.s32.totalorder %s24, 0
      %p166 = por %p164, %p165
      %s168 = sadd.s32 %s167, 1
      %p171 = scmp.eq.s32.totalorder %s18, 1
      %p172 = scmp.ne.s32.totalorder %s167, %s169
      %p173 = scmp.eq.s32.totalorder %s18, 0
      %p174 = por %p172, %p173
      %p175 = scmp.ne.s32.totalorder %s167, %s169
      %p176 = scmp.eq.s32.totalorder %s23, 1
      %p177 = por %p175, %p176
      %p178 = scmp.ne.s32.totalorder %s169, %s170
      %p179 = scmp.eq.s32.totalorder %s23, 0
      %p180 = por %p178, %p179
      %p181 = scmp.ne.s32.totalorder %s169, %s170
      %p182 = scmp.eq.s32.totalorder %s24, 1
      %p183 = por %p181, %p182
      %p185 = scmp.ne.s32.totalorder %s170, %s184
      %p186 = scmp.eq.s32.totalorder %s24, 0
      %p187 = por %p185, %p186
      %s189 = sadd.s32 %s188, 1
      %p192 = scmp.eq.s32.totalorder %s18, 1
      %p193 = scmp.ne.s32.totalorder %s188, %s190
      %p194 = scmp.eq.s32.totalorder %s18, 0
      %p195 = por %p193, %p194
      %p196 = scmp.ne.s32.totalorder %s188, %s190
      %p197 = scmp.eq.s32.totalorder %s23, 1
      %p198 = por %p196, %p197
      %p199 = scmp.ne.s32.totalorder %s190, %s191
      %p200 = scmp.eq.s32.totalorder %s23, 0
      %p201 = por %p199, %p200
      %p202 = scmp.ne.s32.totalorder %s190, %s191
      %p203 = scmp.eq.s32.totalorder %s24, 1
      %p204 = por %p202, %p203
      %p206 = scmp.ne.s32.totalorder %s191, %s205
      %p207 = scmp.eq.s32.totalorder %s24, 0
      %p208 = por %p206, %p207
      %s210 = sadd.s32 %s209, 1
      %p213 = scmp.eq.s32.totalorder %s18, 1
      %p214 = scmp.ne.s32.totalorder %s209, %s211
      %p215 = scmp.eq.s32.totalorder %s18, 0
      %p216 = por %p214, %p215
      %p217 = scmp.ne.s32.totalorder %s209, %s211
      %p218 = scmp.eq.s32.totalorder %s23, 1
      %p219 = por %p217, %p218
      %p220 = scmp.ne.s32.totalorder %s211, %s212
      %p221 = scmp.eq.s32.totalorder %s23, 0
      %p222 = por %p220, %p221
      %p223 = scmp.ne.s32.totalorder %s211, %s212
      %p224 = scmp.eq.s32.totalorder %s24, 1
      %p225 = por %p223, %p224
      %p227 = scmp.ne.s32.totalorder %s212, %s226
      %p228 = scmp.eq.s32.totalorder %s24, 0
      %p229 = por %p227, %p228
      %s231 = sadd.s32 %s230, 1
      %p234 = scmp.eq.s32.totalorder %s18, 1
      %p235 = scmp.ne.s32.totalorder %s230, %s232
      %p236 = scmp.eq.s32.totalorder %s18, 0
      %p237 = por %p235, %p236
      %p238 = scmp.ne.s32.totalorder %s230, %s232
      %p239 = scmp.eq.s32.totalorder %s23, 1
      %p240 = por %p238, %p239
      %p241 = scmp.ne.s32.totalorder %s232, %s233
      %p242 = scmp.eq.s32.totalorder %s23, 0
      %p243 = por %p241, %p242
      %p244 = scmp.ne.s32.totalorder %s232, %s233
      %p245 = scmp.eq.s32.totalorder %s24, 1
      %p246 = por %p244, %p245
      %p248 = scmp.ne.s32.totalorder %s233, %s247
      %p249 = scmp.eq.s32.totalorder %s24, 0
      %p250 = por %p248, %p249
      %s251 = ssub.s32 %s25, %s37
      %s252 = ssub.s32 %s26, %s33
      %s253 = sor.u32 %s251, %s252
      %p254 = scmp.eq.s32.totalorder %s253, 0
      %s256 = sadd.s32 %s255, 1
      %s257 = scalar_select %p254, %s255, %s256
      %p260 = pneg %p254
      %p261 = scmp.eq.s32.totalorder %s18, 1
      %p262 = por %p260, %p261
      %p263 = scmp.ne.s32.totalorder %s255, %s258
      %p264 = scmp.eq.s32.totalorder %s18, 0
      %p265 = por %p263, %p264
      %p266 = scmp.ne.s32.totalorder %s255, %s258
      %p267 = scmp.eq.s32.totalorder %s23, 1
      %p268 = por %p266, %p267
      %p269 = scmp.ne.s32.totalorder %s258, %s259
      %p270 = scmp.eq.s32.totalorder %s23, 0
      %p271 = por %p269, %p270
      %p272 = scmp.ne.s32.totalorder %s258, %s259
      %p273 = scmp.eq.s32.totalorder %s24, 1
      %p274 = por %p272, %p273
      %p276 = scmp.ne.s32.totalorder %s259, %s275
      %p277 = scmp.eq.s32.totalorder %s24, 0
      %p278 = por %p276, %p277
      %p279 = scmp.le.s32.totalorder 1, %s18
      %p280 = scmp.lt.s32.totalorder %s18, 3
      %p281 = pnand %p279, %p280
      %p282 = pneg %p281
      // Predicated region
      $region9: #{pointnet_fp_forward.1} parent=5 // pred_check
        _
      $region10: #{pointnet_fp_forward.1} parent=5 // pred_check_branch
        %284 = sbr.rel (%p281) target = $region12
      $region11: #{pointnet_fp_forward.1} parent=5 // pred_region
        %s285 = ssub.s32 %s18, 1
        // Predicated region
        $region13: #{pointnet_fp_forward.1} parent=11 // pred_check
          %p286 = pneg %p159
        $region14: #{pointnet_fp_forward.1} parent=11 // pred_check_branch
          %288 = sbr.rel (%p286) target = $region16
        $region15: #{pointnet_fp_forward.1} parent=11 // pred_region
          _
        $region16: #{pointnet_fp_forward.1} parent=11 // pred_fallthru
          _
        // Predicated region
        $region17: #{pointnet_fp_forward.1} parent=11 // pred_check
          %p289 = pneg %p180
        $region18: #{pointnet_fp_forward.1} parent=11 // pred_check_branch
          %291 = sbr.rel (%p289) target = $region20
        $region19: #{pointnet_fp_forward.1} parent=11 // pred_region
          _
        $region20: #{pointnet_fp_forward.1} parent=11 // pred_fallthru
          _
        // Predicated region
        $region21: #{pointnet_fp_forward.1} parent=11 // pred_check
          %p292 = pneg %p201
        $region22: #{pointnet_fp_forward.1} parent=11 // pred_check_branch
          %294 = sbr.rel (%p292) target = $region24
        $region23: #{pointnet_fp_forward.1} parent=11 // pred_region
          _
        $region24: #{pointnet_fp_forward.1} parent=11 // pred_fallthru
          _
        // Predicated region
        $region25: #{pointnet_fp_forward.1} parent=11 // pred_check
          %p295 = pneg %p222
        $region26: #{pointnet_fp_forward.1} parent=11 // pred_check_branch
          %297 = sbr.rel (%p295) target = $region28
        $region27: #{pointnet_fp_forward.1} parent=11 // pred_region
          _
        $region28: #{pointnet_fp_forward.1} parent=11 // pred_fallthru
          _
        // Predicated region
        $region29: #{pointnet_fp_forward.1} parent=11 // pred_check
          %p298 = pneg %p243
        $region30: #{pointnet_fp_forward.1} parent=11 // pred_check_branch
          %300 = sbr.rel (%p298) target = $region32
        $region31: #{pointnet_fp_forward.1} parent=11 // pred_region
          _
        $region32: #{pointnet_fp_forward.1} parent=11 // pred_fallthru
          _
      $region12: #{pointnet_fp_forward.1} parent=5 // pred_fallthru
        _
      %p301 = scmp.lt.s32.totalorder %s18, 2
      // Predicated region
      $region33: #{pointnet_fp_forward.1} parent=5 // pred_check
        %p302 = pneg %p301
      $region34: #{pointnet_fp_forward.1} parent=5 // pred_check_branch
        %304 = sbr.rel (%p302) target = $region36
      $region35: #{pointnet_fp_forward.1} parent=5 // pred_region
        // Predicated region
        $region37: #{pointnet_fp_forward.1} parent=35 // pred_check
          %p305 = pneg %p52
        $region38: #{pointnet_fp_forward.1} parent=35 // pred_check_branch
          %307 = sbr.rel (%p305) target = $region40
        $region39: #{pointnet_fp_forward.1} parent=35 // pred_region
          %s308 = smul.u32 16, %s26
          %p309 = scmp.lt.s32.totalorder %s25, 1
          %s310 = scalar_select %p309, %s25, 1
          %p311 = scmp.lt.s32.totalorder %s308, 15
          %s312 = scalar_select %p311, %s308, 15
          %s313 = smul.addr %s310, 16
          %s314 = sadd.s32 %s312, %s313
          %s315 = smul.addr %s314, 8
          %s316 = scalar_lea.vmem %s0, %s315
          %s317 = smul.u32 16, %s26
        $region40: #{pointnet_fp_forward.1} parent=35 // pred_fallthru
          _
        // Predicated region
        $region41: #{pointnet_fp_forward.1} parent=35 // pred_check
          %p318 = pneg %p78
        $region42: #{pointnet_fp_forward.1} parent=35 // pred_check_branch
          %320 = sbr.rel (%p318) target = $region44
        $region43: #{pointnet_fp_forward.1} parent=35 // pred_region
          %p321 = scmp.lt.s32.totalorder %s25, 1
          %s322 = scalar_select %p321, %s25, 1
          %s323 = smul.addr %s322, 8
          %s324 = scalar_lea.vmem %s1, %s323
        $region44: #{pointnet_fp_forward.1} parent=35 // pred_fallthru
          _
        // Predicated region
        $region45: #{pointnet_fp_forward.1} parent=35 // pred_check
          %p325 = pneg %p106
        $region46: #{pointnet_fp_forward.1} parent=35 // pred_check_branch
          %327 = sbr.rel (%p325) target = $region48
        $region47: #{pointnet_fp_forward.1} parent=35 // pred_region
          %s328 = smul.u32 16, %s26
          %p329 = scmp.lt.s32.totalorder %s25, 1
          %s330 = scalar_select %p329, %s25, 1
          %p331 = scmp.lt.s32.totalorder %s328, 15
          %s332 = scalar_select %p331, %s328, 15
          %s333 = smul.addr %s330, 16
          %s334 = sadd.s32 %s332, %s333
          %s335 = smul.addr %s334, 8
          %s336 = scalar_lea.vmem %s2, %s335
          %s337 = smul.u32 16, %s26
        $region48: #{pointnet_fp_forward.1} parent=35 // pred_fallthru
          _
        // Predicated region
        $region49: #{pointnet_fp_forward.1} parent=35 // pred_check
          %p338 = pneg %p132
        $region50: #{pointnet_fp_forward.1} parent=35 // pred_check_branch
          %340 = sbr.rel (%p338) target = $region52
        $region51: #{pointnet_fp_forward.1} parent=35 // pred_region
          %p341 = scmp.lt.s32.totalorder %s25, 1
          %s342 = scalar_select %p341, %s25, 1
          %s343 = smul.addr %s342, 2
          %s344 = smul.addr %s343, 8
          %s345 = scalar_lea.vmem %s3, %s344
        $region52: #{pointnet_fp_forward.1} parent=35 // pred_fallthru
          _
      $region36: #{pointnet_fp_forward.1} parent=5 // pred_fallthru
        _
      %p346 = scmp.le.s32.totalorder 1, %s18
      %p347 = scmp.lt.s32.totalorder %s18, 3
      %p348 = pnand %p346, %p347
      %p349 = pneg %p348
      // Predicated region
      $region53: #{pointnet_fp_forward.1} parent=5 // pred_check
        _
      $region54: #{pointnet_fp_forward.1} parent=5 // pred_check_branch
        %351 = sbr.rel (%p348) target = $region56
      $region55: #{pointnet_fp_forward.1} parent=5 // pred_region
        %s352 = ssub.s32 %s18, 1
        %s353 = smul.u32 16, %s28
        %p354 = scmp.lt.s32.totalorder %s27, 1
        %s355 = scalar_select %p354, %s27, 1
        %p356 = scmp.lt.s32.totalorder %s353, 15
        %s357 = scalar_select %p356, %s353, 15
        %s358 = smul.addr %s355, 16
        %s359 = sadd.s32 %s357, %s358
        %s360 = smul.addr %s359, 8
        %s361 = scalar_lea.vmem %s0, %s360
        %p362 = pneg %p58
        %p363 = pneg %p55
        %p364 = scmp.lt.s32.totalorder %s27, 1
        %s365 = scalar_select %p364, %s27, 1
        %s366 = smul.addr %s365, 8
        %s367 = scalar_lea.vmem %s1, %s366
        %p368 = pneg %p84
        %p369 = pneg %p81
        %s370 = smul.u32 16, %s28
        %p371 = scmp.lt.s32.totalorder %s27, 1
        %s372 = scalar_select %p371, %s27, 1
        %p373 = scmp.lt.s32.totalorder %s370, 15
        %s374 = scalar_select %p373, %s370, 15
        %s375 = smul.addr %s372, 16
        %s376 = sadd.s32 %s374, %s375
        %s377 = smul.addr %s376, 8
        %s378 = scalar_lea.vmem %s2, %s377
        %p379 = pneg %p112
        %p380 = pneg %p109
        %p381 = scmp.lt.s32.totalorder %s27, 1
        %s382 = scalar_select %p381, %s27, 1
        %s383 = smul.addr %s382, 2
        %s384 = smul.addr %s383, 8
        %s385 = scalar_lea.vmem %s3, %s384
        %p386 = pneg %p138
        %p387 = pneg %p135
        %p388 = pneg %p159
        %p389 = pneg %p156
        %p390 = pneg %p180
        %p391 = pneg %p177
        %p392 = pneg %p201
        %p393 = pneg %p198
        %p394 = pneg %p222
        %p395 = pneg %p219
        %p396 = pneg %p243
        %p397 = pneg %p240
        %p398 = pneg %p271
        %p399 = pneg %p268
        %s400 = sand.u32 %s258, 1
        %s401 = scalar_lea.sflag [#allocation3], %s400
        %s402 = sand.u32 %s258, 1
        %s403 = smul.addr %s402, 32
        %s404 = scalar_lea.vmem [#allocation2], %s403
        %s405 = smul.u32 16, %s28
        %p406 = scmp.lt.s32.totalorder %s27, 1
        %s407 = scalar_select %p406, %s27, 1
        %p408 = scmp.lt.s32.totalorder %s405, 15
        %s409 = scalar_select %p408, %s405, 15
        %s410 = smul.addr %s407, 16
        %s411 = sadd.s32 %s409, %s410
        %s412 = smul.addr %s411, 8
        %s413 = scalar_lea.vmem %s0, %s412
        %s414 = smul.u32 16, %s28
        %p415 = scmp.lt.s32.totalorder %s27, 1
        %s416 = scalar_select %p415, %s27, 1
        %s417 = smul.addr %s416, 8
        %s418 = scalar_lea.vmem %s1, %s417
        %s419 = smul.u32 16, %s28
        %p420 = scmp.lt.s32.totalorder %s27, 1
        %s421 = scalar_select %p420, %s27, 1
        %p422 = scmp.lt.s32.totalorder %s419, 15
        %s423 = scalar_select %p422, %s419, 15
        %s424 = smul.addr %s421, 16
        %s425 = sadd.s32 %s423, %s424
        %s426 = smul.addr %s425, 8
        %s427 = scalar_lea.vmem %s2, %s426
        %s428 = smul.u32 16, %s28
        %p429 = scmp.lt.s32.totalorder %s27, 1
        %s430 = scalar_select %p429, %s27, 1
        %s431 = smul.addr %s430, 2
        %s432 = smul.addr %s431, 8
        %s433 = scalar_lea.vmem %s3, %s432
        %v434 = vld [vmem:[%s413] sm:$0xff]
        %v435 = vld [vmem:[%s413 + $0x8] sm:$0xff]
        %v436 = vld [vmem:[%s413 + $0x10] sm:$0xff]
        %v437 = vld [vmem:[%s413 + $0x18] sm:$0xff]
        %v438 = vld [vmem:[%s413 + $0x20] sm:$0xff]
        %v439 = vld [vmem:[%s413 + $0x28] sm:$0xff]
        %v440 = vld [vmem:[%s413 + $0x30] sm:$0xff]
        %v441 = vld [vmem:[%s413 + $0x38] sm:$0xff]
        %v442 = vld [vmem:[%s413 + $0x40] sm:$0xff]
        %v443 = vld [vmem:[%s413 + $0x48] sm:$0xff]
        %v444 = vld [vmem:[%s413 + $0x50] sm:$0xff]
        %v445 = vld [vmem:[%s413 + $0x58] sm:$0xff]
        %v446 = vld [vmem:[%s413 + $0x60] sm:$0xff]
        %v447 = vld [vmem:[%s413 + $0x68] sm:$0xff]
        %v448 = vld [vmem:[%s413 + $0x70] sm:$0xff]
        %v449 = vld [vmem:[%s413 + $0x78] sm:$0xff]
        %v450 = vld [vmem:[%s418] sm:$0xff]
        %v451 = vld [vmem:[%s433] sm:$0xff]
        %v452 = vld [vmem:[%s433 + $0x8] sm:$0xff]
        %vm453 = vcmask 64512
        %v455 = vsel %vm453, %v434, 0
        %v458 = vsel %vm453, %v435, 0
        %v461 = vsel %vm453, %v436, 0
        %v464 = vsel %vm453, %v437, 0
        %v467 = vsel %vm453, %v438, 0
        %v470 = vsel %vm453, %v439, 0
        %v473 = vsel %vm453, %v440, 0
        %v476 = vsel %vm453, %v441, 0
        %v479 = vsel %vm453, %v442, 0
        %v482 = vsel %vm453, %v443, 0
        %v485 = vsel %vm453, %v444, 0
        %v488 = vsel %vm453, %v445, 0
        %v491 = vsel %vm453, %v446, 0
        %v494 = vsel %vm453, %v447, 0
        %v497 = vsel %vm453, %v448, 0
        %v500 = vsel %vm453, %v449, 0
        %502 = vmatprep.subr.mxu0 0.0
        %503 = vmatpush1.msra.mxu0 %v450
        %504 = vmatprep.subr.mxu0 0.0
        %505 = vmatpush1.msra.mxu0 0.0
        %506 = vmatprep.subr.mxu0 0.0
        %507 = vmatpush1.msra.mxu0 0.0
        %508 = vmatprep.subr.mxu0 0.0
        %509 = vmatpush1.msra.mxu0 0.0
        %510 = vmatprep.subr.mxu0 0.0
        %511 = vmatpush1.msra.mxu0 0.0
        %512 = vmatprep.subr.mxu0 0.0
        %513 = vmatpush1.msra.mxu0 0.0
        %514 = vmatprep.subr.mxu0 0.0
        %515 = vmatpush1.msra.mxu0 0.0
        %516 = vmatprep.subr.mxu0 0.0
        %517 = vmatpush1.msra.mxu0 0.0
        %518 = vmatprep.subr.mxu0 0.0
        %519 = vmatpush1.msra.mxu0 0.0
        %520 = vmatprep.subr.mxu0 0.0
        %521 = vmatpush1.msra.mxu0 0.0
        %522 = vmatprep.subr.mxu0 0.0
        %523 = vmatpush1.msra.mxu0 0.0
        %524 = vmatprep.subr.mxu0 0.0
        %525 = vmatpush1.msra.mxu0 0.0
        %526 = vmatprep.subr.mxu0 0.0
        %527 = vmatpush1.msra.mxu0 0.0
        %528 = vmatprep.subr.mxu0 0.0
        %529 = vmatpush1.msra.mxu0 0.0
        %530 = vmatprep.subr.mxu0 0.0
        %531 = vmatpush1.msra.mxu0 0.0
        %532 = vmatprep.subr.mxu0 0.0
        %533 = vmatpush1.msra.mxu0 0.0
        %534 = vmatprep.subr.mxu0 0.0
        %535 = vmatpush1.msra.mxu0 0.0
        %536 = vmatprep.subr.mxu0 0.0
        %537 = vmatpush1.msra.mxu0 0.0
        %538 = vmatprep.subr.mxu0 0.0
        %539 = vmatpush1.msra.mxu0 0.0
        %540 = vmatprep.subr.mxu0 0.0
        %541 = vmatpush1.msra.mxu0 0.0
        %542 = vmatprep.subr.mxu0 0.0
        %543 = vmatpush1.msra.mxu0 0.0
        %544 = vmatprep.subr.mxu0 0.0
        %545 = vmatpush1.msra.mxu0 0.0
        %546 = vmatprep.subr.mxu0 0.0
        %547 = vmatpush1.msra.mxu0 0.0
        %548 = vmatprep.subr.mxu0 0.0
        %549 = vmatpush1.msra.mxu0 0.0
        %550 = vmatprep.subr.mxu0 0.0
        %551 = vmatpush1.msra.mxu0 0.0
        %552 = vmatprep.subr.mxu0 0.0
        %553 = vmatpush1.msra.mxu0 0.0
        %554 = vmatprep.subr.mxu0 0.0
        %555 = vmatpush1.msra.mxu0 0.0
        %556 = vmatprep.subr.mxu0 0.0
        %557 = vmatpush1.msra.mxu0 0.0
        %558 = vmatprep.subr.mxu0 0.0
        %559 = vmatpush1.msra.mxu0 0.0
        %560 = vmatprep.subr.mxu0 0.0
        %561 = vmatpush1.msra.mxu0 0.0
        %562 = vmatprep.subr.mxu0 0.0
        %563 = vmatpush1.msra.mxu0 0.0
        %564 = vmatprep.subr.mxu0 0.0
        %565 = vmatpush1.msra.mxu0 0.0
        %566 = vmatprep.mubr.f32.mxu0 0.0
        %567 = vmatmul.mubr.f32.gmra.mrb[0].mxu0 %v455
        %v568 = vpop.f32.mrb[0].mxu0
        %v569 = vadd.f32 0.0, %v568
        %v570 = vpop.f32.mrb[0].mxu0
        %571 = vmatprep.mubr.f32.mxu0 0.0
        %572 = vmatmul.mubr.f32.gmra.mrb[0].mxu0 %v458
        %v573 = vpop.f32.mrb[0].mxu0
        %v574 = vadd.f32 0.0, %v573
        %v575 = vpop.f32.mrb[0].mxu0
        %576 = vmatprep.mubr.f32.mxu0 0.0
        %577 = vmatmul.mubr.f32.gmra.mrb[0].mxu0 %v461
        %v578 = vpop.f32.mrb[0].mxu0
        %v579 = vadd.f32 0.0, %v578
        %v580 = vpop.f32.mrb[0].mxu0
        %581 = vmatprep.mubr.f32.mxu0 0.0
        %582 = vmatmul.mubr.f32.gmra.mrb[0].mxu0 %v464
        %v583 = vpop.f32.mrb[0].mxu0
        %v584 = vadd.f32 0.0, %v583
        %v585 = vpop.f32.mrb[0].mxu0
        %586 = vmatprep.mubr.f32.mxu0 0.0
        %587 = vmatmul.mubr.f32.gmra.mrb[0].mxu0 %v467
        %v588 = vpop.f32.mrb[0].mxu0
        %v589 = vadd.f32 0.0, %v588
        %v590 = vpop.f32.mrb[0].mxu0
        %591 = vmatprep.mubr.f32.mxu0 0.0
        %592 = vmatmul.mubr.f32.gmra.mrb[0].mxu0 %v470
        %v593 = vpop.f32.mrb[0].mxu0
        %v594 = vadd.f32 0.0, %v593
        %v595 = vpop.f32.mrb[0].mxu0
        %596 = vmatprep.mubr.f32.mxu0 0.0
        %597 = vmatmul.mubr.f32.gmra.mrb[0].mxu0 %v473
        %v598 = vpop.f32.mrb[0].mxu0
        %v599 = vadd.f32 0.0, %v598
        %v600 = vpop.f32.mrb[0].mxu0
        %601 = vmatprep.mubr.f32.mxu0 0.0
        %602 = vmatmul.mubr.f32.gmra.mrb[0].mxu0 %v476
        %v603 = vpop.f32.mrb[0].mxu0
        %v604 = vadd.f32 0.0, %v603
        %v605 = vpop.f32.mrb[0].mxu0
        %606 = vmatprep.mubr.f32.mxu0 0.0
        %607 = vmatmul.mubr.f32.gmra.mrb[0].mxu0 %v479
        %v608 = vpop.f32.mrb[0].mxu0
        %v609 = vadd.f32 0.0, %v608
        %v610 = vpop.f32.mrb[0].mxu0
        %611 = vmatprep.mubr.f32.mxu0 0.0
        %612 = vmatmul.mubr.f32.gmra.mrb[0].mxu0 %v482
        %v613 = vpop.f32.mrb[0].mxu0
        %v614 = vadd.f32 0.0, %v613
        %v615 = vpop.f32.mrb[0].mxu0
        %616 = vmatprep.mubr.f32.mxu0 0.0
        %617 = vmatmul.mubr.f32.gmra.mrb[0].mxu0 %v485
        %v618 = vpop.f32.mrb[0].mxu0
        %v619 = vadd.f32 0.0, %v618
        %v620 = vpop.f32.mrb[0].mxu0
        %621 = vmatprep.mubr.f32.mxu0 0.0
        %622 = vmatmul.mubr.f32.gmra.mrb[0].mxu0 %v488
        %v623 = vpop.f32.mrb[0].mxu0
        %v624 = vadd.f32 0.0, %v623
        %v625 = vpop.f32.mrb[0].mxu0
        %626 = vmatprep.mubr.f32.mxu0 0.0
        %627 = vmatmul.mubr.f32.gmra.mrb[0].mxu0 %v491
        %v628 = vpop.f32.mrb[0].mxu0
        %v629 = vadd.f32 0.0, %v628
        %v630 = vpop.f32.mrb[0].mxu0
        %631 = vmatprep.mubr.f32.mxu0 0.0
        %632 = vmatmul.mubr.f32.gmra.mrb[0].mxu0 %v494
        %v633 = vpop.f32.mrb[0].mxu0
        %v634 = vadd.f32 0.0, %v633
        %v635 = vpop.f32.mrb[0].mxu0
        %636 = vmatprep.mubr.f32.mxu0 0.0
        %637 = vmatmul.mubr.f32.gmra.mrb[0].mxu0 %v497
        %v638 = vpop.f32.mrb[0].mxu0
        %v639 = vadd.f32 0.0, %v638
        %v640 = vpop.f32.mrb[0].mxu0
        %641 = vmatprep.mubr.f32.mxu0 0.0
        %642 = vmatmul.mubr.f32.gmra.mrb[0].mxu0 %v500
        %v643 = vpop.f32.mrb[0].mxu0
        %v644 = vadd.f32 0.0, %v643
        %v645 = vpop.f32.mrb[0].mxu0
        %646 = vdwg.mxu0
        %v647 = vmax.f32 %v569, 0.0
        %v648 = vmax.f32 %v574, 0.0
        %v649 = vmax.f32 %v579, 0.0
        %v650 = vmax.f32 %v584, 0.0
        %v651 = vmax.f32 %v589, 0.0
        %v652 = vmax.f32 %v594, 0.0
        %v653 = vmax.f32 %v599, 0.0
        %v654 = vmax.f32 %v604, 0.0
        %v655 = vmax.f32 %v609, 0.0
        %v656 = vmax.f32 %v614, 0.0
        %v657 = vmax.f32 %v619, 0.0
        %v658 = vmax.f32 %v624, 0.0
        %v659 = vmax.f32 %v629, 0.0
        %v660 = vmax.f32 %v634, 0.0
        %v661 = vmax.f32 %v639, 0.0
        %v662 = vmax.f32 %v644, 0.0
        %v663 = vlaneseq
        %v664 = vand.u32 %v663, 127
        %vm665 = vcmask 130048
        %v666 = vsel %vm665, %v647, inf
        %667 = vmin.xlane.f32.xlu0 %v666
        %v668 = vpop.xlane.xlu0 %667
        %v669 = vsel %vm665, %v648, inf
        %670 = vmin.xlane.f32.xlu0 %v669
        %v671 = vpop.xlane.xlu0 %670
        %v672 = vsel %vm665, %v649, inf
        %673 = vmin.xlane.f32.xlu0 %v672
        %v674 = vpop.xlane.xlu0 %673
        %v675 = vsel %vm665, %v650, inf
        %676 = vmin.xlane.f32.xlu0 %v675
        %v677 = vpop.xlane.xlu0 %676
        %v678 = vsel %vm665, %v651, inf
        %679 = vmin.xlane.f32.xlu0 %v678
        %v680 = vpop.xlane.xlu0 %679
        %v681 = vsel %vm665, %v652, inf
        %682 = vmin.xlane.f32.xlu0 %v681
        %v683 = vpop.xlane.xlu0 %682
        %v684 = vsel %vm665, %v653, inf
        %685 = vmin.xlane.f32.xlu0 %v684
        %v686 = vpop.xlane.xlu0 %685
        %v687 = vsel %vm665, %v654, inf
        %688 = vmin.xlane.f32.xlu0 %v687
        %v689 = vpop.xlane.xlu0 %688
        %v690 = vsel %vm665, %v655, inf
        %691 = vmin.xlane.f32.xlu0 %v690
        %v692 = vpop.xlane.xlu0 %691
        %v693 = vsel %vm665, %v656, inf
        %694 = vmin.xlane.f32.xlu0 %v693
        %v695 = vpop.xlane.xlu0 %694
        %v696 = vsel %vm665, %v657, inf
        %697 = vmin.xlane.f32.xlu0 %v696
        %v698 = vpop.xlane.xlu0 %697
        %v699 = vsel %vm665, %v658, inf
        %700 = vmin.xlane.f32.xlu0 %v699
        %v701 = vpop.xlane.xlu0 %700
        %v702 = vsel %vm665, %v659, inf
        %703 = vmin.xlane.f32.xlu0 %v702
        %v704 = vpop.xlane.xlu0 %703
        %v705 = vsel %vm665, %v660, inf
        %706 = vmin.xlane.f32.xlu0 %v705
        %v707 = vpop.xlane.xlu0 %706
        %v708 = vsel %vm665, %v661, inf
        %709 = vmin.xlane.f32.xlu0 %v708
        %v710 = vpop.xlane.xlu0 %709
        %v711 = vsel %vm665, %v662, inf
        %712 = vmin.xlane.f32.xlu0 %v711
        %v713 = vpop.xlane.xlu0 %712
        %vm714 = vcmp.eq.f32.partialorder %v647, %v668
        %vm715 = vcmp.eq.f32.partialorder %v648, %v671
        %vm716 = vcmp.eq.f32.partialorder %v649, %v674
        %vm717 = vcmp.eq.f32.partialorder %v650, %v677
        %vm718 = vcmp.eq.f32.partialorder %v651, %v680
        %vm719 = vcmp.eq.f32.partialorder %v652, %v683
        %vm720 = vcmp.eq.f32.partialorder %v653, %v686
        %vm721 = vcmp.eq.f32.partialorder %v654, %v689
        %vm722 = vcmp.eq.f32.partialorder %v655, %v692
        %vm723 = vcmp.eq.f32.partialorder %v656, %v695
        %vm724 = vcmp.eq.f32.partialorder %v657, %v698
        %vm725 = vcmp.eq.f32.partialorder %v658, %v701
        %vm726 = vcmp.eq.f32.partialorder %v659, %v704
        %vm727 = vcmp.eq.f32.partialorder %v660, %v707
        %vm728 = vcmp.eq.f32.partialorder %v661, %v710
        %vm729 = vcmp.eq.f32.partialorder %v662, %v713
        %v730 = vsel %vm714, %v664, 16
        %v731 = vsel %vm715, %v664, 16
        %v732 = vsel %vm716, %v664, 16
        %v733 = vsel %vm717, %v664, 16
        %v734 = vsel %vm718, %v664, 16
        %v735 = vsel %vm719, %v664, 16
        %v736 = vsel %vm720, %v664, 16
        %v737 = vsel %vm721, %v664, 16
        %v738 = vsel %vm722, %v664, 16
        %v739 = vsel %vm723, %v664, 16
        %v740 = vsel %vm724, %v664, 16
        %v741 = vsel %vm725, %v664, 16
        %v742 = vsel %vm726, %v664, 16
        %v743 = vsel %vm727, %v664, 16
        %v744 = vsel %vm728, %v664, 16
        %v745 = vsel %vm729, %v664, 16
        %v746 = vsel %vm665, %v730, 2147483647
        %v747 = vand.u32 %v746, 65535
        %v748 = vshra.s32 %v746, 16
        %v749 = vcvt.s32.f32 %v747
        %v750 = vcvt.s32.f32 %v748
        %751 = vmin.xlane.f32.xlu0 %v750
        %v752 = vpop.xlane.xlu0 %751
        %vm753 = vcmp.eq.f32.partialorder %v750, %v752
        %v754 = vsel %vm753, %v749, inf
        %755 = vmin.xlane.f32.xlu0 %v754
        %v756 = vpop.xlane.xlu0 %755
        %v757 = vcvt.f32.s32 %v756
        %v758 = vcvt.f32.s32 %v752
        %v759 = vshll.u32 %v758, 16
        %v760 = vadd.s32 %v759, %v757
        %v761 = vsel %vm665, %v731, 2147483647
        %v762 = vand.u32 %v761, 65535
        %v763 = vshra.s32 %v761, 16
        %v764 = vcvt.s32.f32 %v762
        %v765 = vcvt.s32.f32 %v763
        %766 = vmin.xlane.f32.xlu0 %v765
        %v767 = vpop.xlane.xlu0 %766
        %vm768 = vcmp.eq.f32.partialorder %v765, %v767
        %v769 = vsel %vm768, %v764, inf
        %770 = vmin.xlane.f32.xlu0 %v769
        %v771 = vpop.xlane.xlu0 %770
        %v772 = vcvt.f32.s32 %v771
        %v773 = vcvt.f32.s32 %v767
        %v774 = vshll.u32 %v773, 16
        %v775 = vadd.s32 %v774, %v772
        %v776 = vsel %vm665, %v732, 2147483647
        %v777 = vand.u32 %v776, 65535
        %v778 = vshra.s32 %v776, 16
        %v779 = vcvt.s32.f32 %v777
        %v780 = vcvt.s32.f32 %v778
        %781 = vmin.xlane.f32.xlu0 %v780
        %v782 = vpop.xlane.xlu0 %781
        %vm783 = vcmp.eq.f32.partialorder %v780, %v782
        %v784 = vsel %vm783, %v779, inf
        %785 = vmin.xlane.f32.xlu0 %v784
        %v786 = vpop.xlane.xlu0 %785
        %v787 = vcvt.f32.s32 %v786
        %v788 = vcvt.f32.s32 %v782
        %v789 = vshll.u32 %v788, 16
        %v790 = vadd.s32 %v789, %v787
        %v791 = vsel %vm665, %v733, 2147483647
        %v792 = vand.u32 %v791, 65535
        %v793 = vshra.s32 %v791, 16
        %v794 = vcvt.s32.f32 %v792
        %v795 = vcvt.s32.f32 %v793
        %796 = vmin.xlane.f32.xlu0 %v795
        %v797 = vpop.xlane.xlu0 %796
        %vm798 = vcmp.eq.f32.partialorder %v795, %v797
        %v799 = vsel %vm798, %v794, inf
        %800 = vmin.xlane.f32.xlu0 %v799
        %v801 = vpop.xlane.xlu0 %800
        %v802 = vcvt.f32.s32 %v801
        %v803 = vcvt.f32.s32 %v797
        %v804 = vshll.u32 %v803, 16
        %v805 = vadd.s32 %v804, %v802
        %v806 = vsel %vm665, %v734, 2147483647
        %v807 = vand.u32 %v806, 65535
        %v808 = vshra.s32 %v806, 16
        %v809 = vcvt.s32.f32 %v807
        %v810 = vcvt.s32.f32 %v808
        %811 = vmin.xlane.f32.xlu0 %v810
        %v812 = vpop.xlane.xlu0 %811
        %vm813 = vcmp.eq.f32.partialorder %v810, %v812
        %v814 = vsel %vm813, %v809, inf
        %815 = vmin.xlane.f32.xlu0 %v814
        %v816 = vpop.xlane.xlu0 %815
        %v817 = vcvt.f32.s32 %v816
        %v818 = vcvt.f32.s32 %v812
        %v819 = vshll.u32 %v818, 16
        %v820 = vadd.s32 %v819, %v817
        %v821 = vsel %vm665, %v735, 2147483647
        %v822 = vand.u32 %v821, 65535
        %v823 = vshra.s32 %v821, 16
        %v824 = vcvt.s32.f32 %v822
        %v825 = vcvt.s32.f32 %v823
        %826 = vmin.xlane.f32.xlu0 %v825
        %v827 = vpop.xlane.xlu0 %826
        %vm828 = vcmp.eq.f32.partialorder %v825, %v827
        %v829 = vsel %vm828, %v824, inf
        %830 = vmin.xlane.f32.xlu0 %v829
        %v831 = vpop.xlane.xlu0 %830
        %v832 = vcvt.f32.s32 %v831
        %v833 = vcvt.f32.s32 %v827
        %v834 = vshll.u32 %v833, 16
        %v835 = vadd.s32 %v834, %v832
        %v836 = vsel %vm665, %v736, 2147483647
        %v837 = vand.u32 %v836, 65535
        %v838 = vshra.s32 %v836, 16
        %v839 = vcvt.s32.f32 %v837
        %v840 = vcvt.s32.f32 %v838
        %841 = vmin.xlane.f32.xlu0 %v840
        %v842 = vpop.xlane.xlu0 %841
        %vm843 = vcmp.eq.f32.partialorder %v840, %v842
        %v844 = vsel %vm843, %v839, inf
        %845 = vmin.xlane.f32.xlu0 %v844
        %v846 = vpop.xlane.xlu0 %845
        %v847 = vcvt.f32.s32 %v846
        %v848 = vcvt.f32.s32 %v842
        %v849 = vshll.u32 %v848, 16
        %v850 = vadd.s32 %v849, %v847
        %v851 = vsel %vm665, %v737, 2147483647
        %v852 = vand.u32 %v851, 65535
        %v853 = vshra.s32 %v851, 16
        %v854 = vcvt.s32.f32 %v852
        %v855 = vcvt.s32.f32 %v853
        %856 = vmin.xlane.f32.xlu0 %v855
        %v857 = vpop.xlane.xlu0 %856
        %vm858 = vcmp.eq.f32.partialorder %v855, %v857
        %v859 = vsel %vm858, %v854, inf
        %860 = vmin.xlane.f32.xlu0 %v859
        %v861 = vpop.xlane.xlu0 %860
        %v862 = vcvt.f32.s32 %v861
        %v863 = vcvt.f32.s32 %v857
        %v864 = vshll.u32 %v863, 16
        %v865 = vadd.s32 %v864, %v862
        %v866 = vsel %vm665, %v738, 2147483647
        %v867 = vand.u32 %v866, 65535
        %v868 = vshra.s32 %v866, 16
        %v869 = vcvt.s32.f32 %v867
        %v870 = vcvt.s32.f32 %v868
        %871 = vmin.xlane.f32.xlu0 %v870
        %v872 = vpop.xlane.xlu0 %871
        %vm873 = vcmp.eq.f32.partialorder %v870, %v872
        %v874 = vsel %vm873, %v869, inf
        %875 = vmin.xlane.f32.xlu0 %v874
        %v876 = vpop.xlane.xlu0 %875
        %v877 = vcvt.f32.s32 %v876
        %v878 = vcvt.f32.s32 %v872
        %v879 = vshll.u32 %v878, 16
        %v880 = vadd.s32 %v879, %v877
        %v881 = vsel %vm665, %v739, 2147483647
        %v882 = vand.u32 %v881, 65535
        %v883 = vshra.s32 %v881, 16
        %v884 = vcvt.s32.f32 %v882
        %v885 = vcvt.s32.f32 %v883
        %886 = vmin.xlane.f32.xlu0 %v885
        %v887 = vpop.xlane.xlu0 %886
        %vm888 = vcmp.eq.f32.partialorder %v885, %v887
        %v889 = vsel %vm888, %v884, inf
        %890 = vmin.xlane.f32.xlu0 %v889
        %v891 = vpop.xlane.xlu0 %890
        %v892 = vcvt.f32.s32 %v891
        %v893 = vcvt.f32.s32 %v887
        %v894 = vshll.u32 %v893, 16
        %v895 = vadd.s32 %v894, %v892
        %v896 = vsel %vm665, %v740, 2147483647
        %v897 = vand.u32 %v896, 65535
        %v898 = vshra.s32 %v896, 16
        %v899 = vcvt.s32.f32 %v897
        %v900 = vcvt.s32.f32 %v898
        %901 = vmin.xlane.f32.xlu0 %v900
        %v902 = vpop.xlane.xlu0 %901
        %vm903 = vcmp.eq.f32.partialorder %v900, %v902
        %v904 = vsel %vm903, %v899, inf
        %905 = vmin.xlane.f32.xlu0 %v904
        %v906 = vpop.xlane.xlu0 %905
        %v907 = vcvt.f32.s32 %v906
        %v908 = vcvt.f32.s32 %v902
        %v909 = vshll.u32 %v908, 16
        %v910 = vadd.s32 %v909, %v907
        %v911 = vsel %vm665, %v741, 2147483647
        %v912 = vand.u32 %v911, 65535
        %v913 = vshra.s32 %v911, 16
        %v914 = vcvt.s32.f32 %v912
        %v915 = vcvt.s32.f32 %v913
        %916 = vmin.xlane.f32.xlu0 %v915
        %v917 = vpop.xlane.xlu0 %916
        %vm918 = vcmp.eq.f32.partialorder %v915, %v917
        %v919 = vsel %vm918, %v914, inf
        %920 = vmin.xlane.f32.xlu0 %v919
        %v921 = vpop.xlane.xlu0 %920
        %v922 = vcvt.f32.s32 %v921
        %v923 = vcvt.f32.s32 %v917
        %v924 = vshll.u32 %v923, 16
        %v925 = vadd.s32 %v924, %v922
        %v926 = vsel %vm665, %v742, 2147483647
        %v927 = vand.u32 %v926, 65535
        %v928 = vshra.s32 %v926, 16
        %v929 = vcvt.s32.f32 %v927
        %v930 = vcvt.s32.f32 %v928
        %931 = vmin.xlane.f32.xlu0 %v930
        %v932 = vpop.xlane.xlu0 %931
        %vm933 = vcmp.eq.f32.partialorder %v930, %v932
        %v934 = vsel %vm933, %v929, inf
        %935 = vmin.xlane.f32.xlu0 %v934
        %v936 = vpop.xlane.xlu0 %935
        %v937 = vcvt.f32.s32 %v936
        %v938 = vcvt.f32.s32 %v932
        %v939 = vshll.u32 %v938, 16
        %v940 = vadd.s32 %v939, %v937
        %v941 = vsel %vm665, %v743, 2147483647
        %v942 = vand.u32 %v941, 65535
        %v943 = vshra.s32 %v941, 16
        %v944 = vcvt.s32.f32 %v942
        %v945 = vcvt.s32.f32 %v943
        %946 = vmin.xlane.f32.xlu0 %v945
        %v947 = vpop.xlane.xlu0 %946
        %vm948 = vcmp.eq.f32.partialorder %v945, %v947
        %v949 = vsel %vm948, %v944, inf
        %950 = vmin.xlane.f32.xlu0 %v949
        %v951 = vpop.xlane.xlu0 %950
        %v952 = vcvt.f32.s32 %v951
        %v953 = vcvt.f32.s32 %v947
        %v954 = vshll.u32 %v953, 16
        %v955 = vadd.s32 %v954, %v952
        %v956 = vsel %vm665, %v744, 2147483647
        %v957 = vand.u32 %v956, 65535
        %v958 = vshra.s32 %v956, 16
        %v959 = vcvt.s32.f32 %v957
        %v960 = vcvt.s32.f32 %v958
        %961 = vmin.xlane.f32.xlu0 %v960
        %v962 = vpop.xlane.xlu0 %961
        %vm963 = vcmp.eq.f32.partialorder %v960, %v962
        %v964 = vsel %vm963, %v959, inf
        %965 = vmin.xlane.f32.xlu0 %v964
        %v966 = vpop.xlane.xlu0 %965
        %v967 = vcvt.f32.s32 %v966
        %v968 = vcvt.f32.s32 %v962
        %v969 = vshll.u32 %v968, 16
        %v970 = vadd.s32 %v969, %v967
        %v971 = vsel %vm665, %v745, 2147483647
        %v972 = vand.u32 %v971, 65535
        %v973 = vshra.s32 %v971, 16
        %v974 = vcvt.s32.f32 %v972
        %v975 = vcvt.s32.f32 %v973
        %976 = vmin.xlane.f32.xlu0 %v975
        %v977 = vpop.xlane.xlu0 %976
        %vm978 = vcmp.eq.f32.partialorder %v975, %v977
        %v979 = vsel %vm978, %v974, inf
        %980 = vmin.xlane.f32.xlu0 %v979
        %v981 = vpop.xlane.xlu0 %980
        %v982 = vcvt.f32.s32 %v981
        %v983 = vcvt.f32.s32 %v977
        %v984 = vshll.u32 %v983, 16
        %v985 = vadd.s32 %v984, %v982
        %vm986 = vcmp.eq.s32.totalorder %v664, %v760
        %vm987 = vcmp.eq.s32.totalorder %v664, %v775
        %vm988 = vcmp.eq.s32.totalorder %v664, %v790
        %vm989 = vcmp.eq.s32.totalorder %v664, %v805
        %vm990 = vcmp.eq.s32.totalorder %v664, %v820
        %vm991 = vcmp.eq.s32.totalorder %v664, %v835
        %vm992 = vcmp.eq.s32.totalorder %v664, %v850
        %vm993 = vcmp.eq.s32.totalorder %v664, %v865
        %vm994 = vcmp.eq.s32.totalorder %v664, %v880
        %vm995 = vcmp.eq.s32.totalorder %v664, %v895
        %vm996 = vcmp.eq.s32.totalorder %v664, %v910
        %vm997 = vcmp.eq.s32.totalorder %v664, %v925
        %vm998 = vcmp.eq.s32.totalorder %v664, %v940
        %vm999 = vcmp.eq.s32.totalorder %v664, %v955
        %vm1000 = vcmp.eq.s32.totalorder %v664, %v970
        %vm1001 = vcmp.eq.s32.totalorder %v664, %v985
        %v1002 = vadd.f32 %v668, 1e-08
        %v1003 = vadd.f32 %v671, 1e-08
        %v1004 = vadd.f32 %v674, 1e-08
        %v1005 = vadd.f32 %v677, 1e-08
        %v1006 = vadd.f32 %v680, 1e-08
        %v1007 = vadd.f32 %v683, 1e-08
        %v1008 = vadd.f32 %v686, 1e-08
        %v1009 = vadd.f32 %v689, 1e-08
        %v1010 = vadd.f32 %v692, 1e-08
        %v1011 = vadd.f32 %v695, 1e-08
        %v1012 = vadd.f32 %v698, 1e-08
        %v1013 = vadd.f32 %v701, 1e-08
        %v1014 = vadd.f32 %v704, 1e-08
        %v1015 = vadd.f32 %v707, 1e-08
        %v1016 = vadd.f32 %v710, 1e-08
        %v1017 = vadd.f32 %v713, 1e-08
        %v1018 = vrcp.pop %v1002
        %v1019 = vrcp.pop %v1003
        %v1020 = vrcp.pop %v1004
        %v1021 = vrcp.pop %v1005
        %v1022 = vrcp.pop %v1006
        %v1023 = vrcp.pop %v1007
        %v1024 = vrcp.pop %v1008
        %v1025 = vrcp.pop %v1009
        %v1026 = vrcp.pop %v1010
        %v1027 = vrcp.pop %v1011
        %v1028 = vrcp.pop %v1012
        %v1029 = vrcp.pop %v1013
        %v1030 = vrcp.pop %v1014
        %v1031 = vrcp.pop %v1015
        %v1032 = vrcp.pop %v1016
        %v1033 = vrcp.pop %v1017
        %v1034 = vsel %vm986, %v1018, 0.0
        %v1035 = vsel %vm987, %v1019, 0.0
        %v1036 = vsel %vm988, %v1020, 0.0
        %v1037 = vsel %vm989, %v1021, 0.0
        %v1038 = vsel %vm990, %v1022, 0.0
        %v1039 = vsel %vm991, %v1023, 0.0
        %v1040 = vsel %vm992, %v1024, 0.0
        %v1041 = vsel %vm993, %v1025, 0.0
        %v1042 = vsel %vm994, %v1026, 0.0
        %v1043 = vsel %vm995, %v1027, 0.0
        %v1044 = vsel %vm996, %v1028, 0.0
        %v1045 = vsel %vm997, %v1029, 0.0
        %v1046 = vsel %vm998, %v1030, 0.0
        %v1047 = vsel %vm999, %v1031, 0.0
        %v1048 = vsel %vm1000, %v1032, 0.0
        %v1049 = vsel %vm1001, %v1033, 0.0
        %v1050 = vadd.f32 %v1018, 0.0
        %v1051 = vadd.f32 %v1019, 0.0
        %v1052 = vadd.f32 %v1020, 0.0
        %v1053 = vadd.f32 %v1021, 0.0
        %v1054 = vadd.f32 %v1022, 0.0
        %v1055 = vadd.f32 %v1023, 0.0
        %v1056 = vadd.f32 %v1024, 0.0
        %v1057 = vadd.f32 %v1025, 0.0
        %v1058 = vadd.f32 %v1026, 0.0
        %v1059 = vadd.f32 %v1027, 0.0
        %v1060 = vadd.f32 %v1028, 0.0
        %v1061 = vadd.f32 %v1029, 0.0
        %v1062 = vadd.f32 %v1030, 0.0
        %v1063 = vadd.f32 %v1031, 0.0
        %v1064 = vadd.f32 %v1032, 0.0
        %v1065 = vadd.f32 %v1033, 0.0
        %v1066 = vsel %vm986, inf, %v647
        %v1067 = vsel %vm987, inf, %v648
        %v1068 = vsel %vm988, inf, %v649
        %v1069 = vsel %vm989, inf, %v650
        %v1070 = vsel %vm990, inf, %v651
        %v1071 = vsel %vm991, inf, %v652
        %v1072 = vsel %vm992, inf, %v653
        %v1073 = vsel %vm993, inf, %v654
        %v1074 = vsel %vm994, inf, %v655
        %v1075 = vsel %vm995, inf, %v656
        %v1076 = vsel %vm996, inf, %v657
        %v1077 = vsel %vm997, inf, %v658
        %v1078 = vsel %vm998, inf, %v659
        %v1079 = vsel %vm999, inf, %v660
        %v1080 = vsel %vm1000, inf, %v661
        %v1081 = vsel %vm1001, inf, %v662
        %v1082 = vsel %vm665, %v1066, inf
        %1083 = vmin.xlane.f32.xlu0 %v1082
        %v1084 = vpop.xlane.xlu0 %1083
        %v1085 = vsel %vm665, %v1067, inf
        %1086 = vmin.xlane.f32.xlu0 %v1085
        %v1087 = vpop.xlane.xlu0 %1086
        %v1088 = vsel %vm665, %v1068, inf
        %1089 = vmin.xlane.f32.xlu0 %v1088
        %v1090 = vpop.xlane.xlu0 %1089
        %v1091 = vsel %vm665, %v1069, inf
        %1092 = vmin.xlane.f32.xlu0 %v1091
        %v1093 = vpop.xlane.xlu0 %1092
        %v1094 = vsel %vm665, %v1070, inf
        %1095 = vmin.xlane.f32.xlu0 %v1094
        %v1096 = vpop.xlane.xlu0 %1095
        %v1097 = vsel %vm665, %v1071, inf
        %1098 = vmin.xlane.f32.xlu0 %v1097
        %v1099 = vpop.xlane.xlu0 %1098
        %v1100 = vsel %vm665, %v1072, inf
        %1101 = vmin.xlane.f32.xlu0 %v1100
        %v1102 = vpop.xlane.xlu0 %1101
        %v1103 = vsel %vm665, %v1073, inf
        %1104 = vmin.xlane.f32.xlu0 %v1103
        %v1105 = vpop.xlane.xlu0 %1104
        %v1106 = vsel %vm665, %v1074, inf
        %1107 = vmin.xlane.f32.xlu0 %v1106
        %v1108 = vpop.xlane.xlu0 %1107
        %v1109 = vsel %vm665, %v1075, inf
        %1110 = vmin.xlane.f32.xlu0 %v1109
        %v1111 = vpop.xlane.xlu0 %1110
        %v1112 = vsel %vm665, %v1076, inf
        %1113 = vmin.xlane.f32.xlu0 %v1112
        %v1114 = vpop.xlane.xlu0 %1113
        %v1115 = vsel %vm665, %v1077, inf
        %1116 = vmin.xlane.f32.xlu0 %v1115
        %v1117 = vpop.xlane.xlu0 %1116
        %v1118 = vsel %vm665, %v1078, inf
        %1119 = vmin.xlane.f32.xlu0 %v1118
        %v1120 = vpop.xlane.xlu0 %1119
        %v1121 = vsel %vm665, %v1079, inf
        %1122 = vmin.xlane.f32.xlu0 %v1121
        %v1123 = vpop.xlane.xlu0 %1122
        %v1124 = vsel %vm665, %v1080, inf
        %1125 = vmin.xlane.f32.xlu0 %v1124
        %v1126 = vpop.xlane.xlu0 %1125
        %v1127 = vsel %vm665, %v1081, inf
        %1128 = vmin.xlane.f32.xlu0 %v1127
        %v1129 = vpop.xlane.xlu0 %1128
        %vm1130 = vcmp.eq.f32.partialorder %v1066, %v1084
        %vm1131 = vcmp.eq.f32.partialorder %v1067, %v1087
        %vm1132 = vcmp.eq.f32.partialorder %v1068, %v1090
        %vm1133 = vcmp.eq.f32.partialorder %v1069, %v1093
        %vm1134 = vcmp.eq.f32.partialorder %v1070, %v1096
        %vm1135 = vcmp.eq.f32.partialorder %v1071, %v1099
        %vm1136 = vcmp.eq.f32.partialorder %v1072, %v1102
        %vm1137 = vcmp.eq.f32.partialorder %v1073, %v1105
        %vm1138 = vcmp.eq.f32.partialorder %v1074, %v1108
        %vm1139 = vcmp.eq.f32.partialorder %v1075, %v1111
        %vm1140 = vcmp.eq.f32.partialorder %v1076, %v1114
        %vm1141 = vcmp.eq.f32.partialorder %v1077, %v1117
        %vm1142 = vcmp.eq.f32.partialorder %v1078, %v1120
        %vm1143 = vcmp.eq.f32.partialorder %v1079, %v1123
        %vm1144 = vcmp.eq.f32.partialorder %v1080, %v1126
        %vm1145 = vcmp.eq.f32.partialorder %v1081, %v1129
        %v1146 = vsel %vm1130, %v664, 16
        %v1147 = vsel %vm1131, %v664, 16
        %v1148 = vsel %vm1132, %v664, 16
        %v1149 = vsel %vm1133, %v664, 16
        %v1150 = vsel %vm1134, %v664, 16
        %v1151 = vsel %vm1135, %v664, 16
        %v1152 = vsel %vm1136, %v664, 16
        %v1153 = vsel %vm1137, %v664, 16
        %v1154 = vsel %vm1138, %v664, 16
        %v1155 = vsel %vm1139, %v664, 16
        %v1156 = vsel %vm1140, %v664, 16
        %v1157 = vsel %vm1141, %v664, 16
        %v1158 = vsel %vm1142, %v664, 16
        %v1159 = vsel %vm1143, %v664, 16
        %v1160 = vsel %vm1144, %v664, 16
        %v1161 = vsel %vm1145, %v664, 16
        %v1162 = vsel %vm665, %v1146, 2147483647
        %v1163 = vand.u32 %v1162, 65535
        %v1164 = vshra.s32 %v1162, 16
        %v1165 = vcvt.s32.f32 %v1163
        %v1166 = vcvt.s32.f32 %v1164
        %1167 = vmin.xlane.f32.xlu0 %v1166
        %v1168 = vpop.xlane.xlu0 %1167
        %vm1169 = vcmp.eq.f32.partialorder %v1166, %v1168
        %v1170 = vsel %vm1169, %v1165, inf
        %1171 = vmin.xlane.f32.xlu0 %v1170
        %v1172 = vpop.xlane.xlu0 %1171
        %v1173 = vcvt.f32.s32 %v1172
        %v1174 = vcvt.f32.s32 %v1168
        %v1175 = vshll.u32 %v1174, 16
        %v1176 = vadd.s32 %v1175, %v1173
        %v1177 = vsel %vm665, %v1147, 2147483647
        %v1178 = vand.u32 %v1177, 65535
        %v1179 = vshra.s32 %v1177, 16
        %v1180 = vcvt.s32.f32 %v1178
        %v1181 = vcvt.s32.f32 %v1179
        %1182 = vmin.xlane.f32.xlu0 %v1181
        %v1183 = vpop.xlane.xlu0 %1182
        %vm1184 = vcmp.eq.f32.partialorder %v1181, %v1183
        %v1185 = vsel %vm1184, %v1180, inf
        %1186 = vmin.xlane.f32.xlu0 %v1185
        %v1187 = vpop.xlane.xlu0 %1186
        %v1188 = vcvt.f32.s32 %v1187
        %v1189 = vcvt.f32.s32 %v1183
        %v1190 = vshll.u32 %v1189, 16
        %v1191 = vadd.s32 %v1190, %v1188
        %v1192 = vsel %vm665, %v1148, 2147483647
        %v1193 = vand.u32 %v1192, 65535
        %v1194 = vshra.s32 %v1192, 16
        %v1195 = vcvt.s32.f32 %v1193
        %v1196 = vcvt.s32.f32 %v1194
        %1197 = vmin.xlane.f32.xlu0 %v1196
        %v1198 = vpop.xlane.xlu0 %1197
        %vm1199 = vcmp.eq.f32.partialorder %v1196, %v1198
        %v1200 = vsel %vm1199, %v1195, inf
        %1201 = vmin.xlane.f32.xlu0 %v1200
        %v1202 = vpop.xlane.xlu0 %1201
        %v1203 = vcvt.f32.s32 %v1202
        %v1204 = vcvt.f32.s32 %v1198
        %v1205 = vshll.u32 %v1204, 16
        %v1206 = vadd.s32 %v1205, %v1203
        %v1207 = vsel %vm665, %v1149, 2147483647
        %v1208 = vand.u32 %v1207, 65535
        %v1209 = vshra.s32 %v1207, 16
        %v1210 = vcvt.s32.f32 %v1208
        %v1211 = vcvt.s32.f32 %v1209
        %1212 = vmin.xlane.f32.xlu0 %v1211
        %v1213 = vpop.xlane.xlu0 %1212
        %vm1214 = vcmp.eq.f32.partialorder %v1211, %v1213
        %v1215 = vsel %vm1214, %v1210, inf
        %1216 = vmin.xlane.f32.xlu0 %v1215
        %v1217 = vpop.xlane.xlu0 %1216
        %v1218 = vcvt.f32.s32 %v1217
        %v1219 = vcvt.f32.s32 %v1213
        %v1220 = vshll.u32 %v1219, 16
        %v1221 = vadd.s32 %v1220, %v1218
        %v1222 = vsel %vm665, %v1150, 2147483647
        %v1223 = vand.u32 %v1222, 65535
        %v1224 = vshra.s32 %v1222, 16
        %v1225 = vcvt.s32.f32 %v1223
        %v1226 = vcvt.s32.f32 %v1224
        %1227 = vmin.xlane.f32.xlu0 %v1226
        %v1228 = vpop.xlane.xlu0 %1227
        %vm1229 = vcmp.eq.f32.partialorder %v1226, %v1228
        %v1230 = vsel %vm1229, %v1225, inf
        %1231 = vmin.xlane.f32.xlu0 %v1230
        %v1232 = vpop.xlane.xlu0 %1231
        %v1233 = vcvt.f32.s32 %v1232
        %v1234 = vcvt.f32.s32 %v1228
        %v1235 = vshll.u32 %v1234, 16
        %v1236 = vadd.s32 %v1235, %v1233
        %v1237 = vsel %vm665, %v1151, 2147483647
        %v1238 = vand.u32 %v1237, 65535
        %v1239 = vshra.s32 %v1237, 16
        %v1240 = vcvt.s32.f32 %v1238
        %v1241 = vcvt.s32.f32 %v1239
        %1242 = vmin.xlane.f32.xlu0 %v1241
        %v1243 = vpop.xlane.xlu0 %1242
        %vm1244 = vcmp.eq.f32.partialorder %v1241, %v1243
        %v1245 = vsel %vm1244, %v1240, inf
        %1246 = vmin.xlane.f32.xlu0 %v1245
        %v1247 = vpop.xlane.xlu0 %1246
        %v1248 = vcvt.f32.s32 %v1247
        %v1249 = vcvt.f32.s32 %v1243
        %v1250 = vshll.u32 %v1249, 16
        %v1251 = vadd.s32 %v1250, %v1248
        %v1252 = vsel %vm665, %v1152, 2147483647
        %v1253 = vand.u32 %v1252, 65535
        %v1254 = vshra.s32 %v1252, 16
        %v1255 = vcvt.s32.f32 %v1253
        %v1256 = vcvt.s32.f32 %v1254
        %1257 = vmin.xlane.f32.xlu0 %v1256
        %v1258 = vpop.xlane.xlu0 %1257
        %vm1259 = vcmp.eq.f32.partialorder %v1256, %v1258
        %v1260 = vsel %vm1259, %v1255, inf
        %1261 = vmin.xlane.f32.xlu0 %v1260
        %v1262 = vpop.xlane.xlu0 %1261
        %v1263 = vcvt.f32.s32 %v1262
        %v1264 = vcvt.f32.s32 %v1258
        %v1265 = vshll.u32 %v1264, 16
        %v1266 = vadd.s32 %v1265, %v1263
        %v1267 = vsel %vm665, %v1153, 2147483647
        %v1268 = vand.u32 %v1267, 65535
        %v1269 = vshra.s32 %v1267, 16
        %v1270 = vcvt.s32.f32 %v1268
        %v1271 = vcvt.s32.f32 %v1269
        %1272 = vmin.xlane.f32.xlu0 %v1271
        %v1273 = vpop.xlane.xlu0 %1272
        %vm1274 = vcmp.eq.f32.partialorder %v1271, %v1273
        %v1275 = vsel %vm1274, %v1270, inf
        %1276 = vmin.xlane.f32.xlu0 %v1275
        %v1277 = vpop.xlane.xlu0 %1276
        %v1278 = vcvt.f32.s32 %v1277
        %v1279 = vcvt.f32.s32 %v1273
        %v1280 = vshll.u32 %v1279, 16
        %v1281 = vadd.s32 %v1280, %v1278
        %v1282 = vsel %vm665, %v1154, 2147483647
        %v1283 = vand.u32 %v1282, 65535
        %v1284 = vshra.s32 %v1282, 16
        %v1285 = vcvt.s32.f32 %v1283
        %v1286 = vcvt.s32.f32 %v1284
        %1287 = vmin.xlane.f32.xlu0 %v1286
        %v1288 = vpop.xlane.xlu0 %1287
        %vm1289 = vcmp.eq.f32.partialorder %v1286, %v1288
        %v1290 = vsel %vm1289, %v1285, inf
        %1291 = vmin.xlane.f32.xlu0 %v1290
        %v1292 = vpop.xlane.xlu0 %1291
        %v1293 = vcvt.f32.s32 %v1292
        %v1294 = vcvt.f32.s32 %v1288
        %v1295 = vshll.u32 %v1294, 16
        %v1296 = vadd.s32 %v1295, %v1293
        %v1297 = vsel %vm665, %v1155, 2147483647
        %v1298 = vand.u32 %v1297, 65535
        %v1299 = vshra.s32 %v1297, 16
        %v1300 = vcvt.s32.f32 %v1298
        %v1301 = vcvt.s32.f32 %v1299
        %1302 = vmin.xlane.f32.xlu0 %v1301
        %v1303 = vpop.xlane.xlu0 %1302
        %vm1304 = vcmp.eq.f32.partialorder %v1301, %v1303
        %v1305 = vsel %vm1304, %v1300, inf
        %1306 = vmin.xlane.f32.xlu0 %v1305
        %v1307 = vpop.xlane.xlu0 %1306
        %v1308 = vcvt.f32.s32 %v1307
        %v1309 = vcvt.f32.s32 %v1303
        %v1310 = vshll.u32 %v1309, 16
        %v1311 = vadd.s32 %v1310, %v1308
        %v1312 = vsel %vm665, %v1156, 2147483647
        %v1313 = vand.u32 %v1312, 65535
        %v1314 = vshra.s32 %v1312, 16
        %v1315 = vcvt.s32.f32 %v1313
        %v1316 = vcvt.s32.f32 %v1314
        %1317 = vmin.xlane.f32.xlu0 %v1316
        %v1318 = vpop.xlane.xlu0 %1317
        %vm1319 = vcmp.eq.f32.partialorder %v1316, %v1318
        %v1320 = vsel %vm1319, %v1315, inf
        %1321 = vmin.xlane.f32.xlu0 %v1320
        %v1322 = vpop.xlane.xlu0 %1321
        %v1323 = vcvt.f32.s32 %v1322
        %v1324 = vcvt.f32.s32 %v1318
        %v1325 = vshll.u32 %v1324, 16
        %v1326 = vadd.s32 %v1325, %v1323
        %v1327 = vsel %vm665, %v1157, 2147483647
        %v1328 = vand.u32 %v1327, 65535
        %v1329 = vshra.s32 %v1327, 16
        %v1330 = vcvt.s32.f32 %v1328
        %v1331 = vcvt.s32.f32 %v1329
        %1332 = vmin.xlane.f32.xlu0 %v1331
        %v1333 = vpop.xlane.xlu0 %1332
        %vm1334 = vcmp.eq.f32.partialorder %v1331, %v1333
        %v1335 = vsel %vm1334, %v1330, inf
        %1336 = vmin.xlane.f32.xlu0 %v1335
        %v1337 = vpop.xlane.xlu0 %1336
        %v1338 = vcvt.f32.s32 %v1337
        %v1339 = vcvt.f32.s32 %v1333
        %v1340 = vshll.u32 %v1339, 16
        %v1341 = vadd.s32 %v1340, %v1338
        %v1342 = vsel %vm665, %v1158, 2147483647
        %v1343 = vand.u32 %v1342, 65535
        %v1344 = vshra.s32 %v1342, 16
        %v1345 = vcvt.s32.f32 %v1343
        %v1346 = vcvt.s32.f32 %v1344
        %1347 = vmin.xlane.f32.xlu0 %v1346
        %v1348 = vpop.xlane.xlu0 %1347
        %vm1349 = vcmp.eq.f32.partialorder %v1346, %v1348
        %v1350 = vsel %vm1349, %v1345, inf
        %1351 = vmin.xlane.f32.xlu0 %v1350
        %v1352 = vpop.xlane.xlu0 %1351
        %v1353 = vcvt.f32.s32 %v1352
        %v1354 = vcvt.f32.s32 %v1348
        %v1355 = vshll.u32 %v1354, 16
        %v1356 = vadd.s32 %v1355, %v1353
        %v1357 = vsel %vm665, %v1159, 2147483647
        %v1358 = vand.u32 %v1357, 65535
        %v1359 = vshra.s32 %v1357, 16
        %v1360 = vcvt.s32.f32 %v1358
        %v1361 = vcvt.s32.f32 %v1359
        %1362 = vmin.xlane.f32.xlu0 %v1361
        %v1363 = vpop.xlane.xlu0 %1362
        %vm1364 = vcmp.eq.f32.partialorder %v1361, %v1363
        %v1365 = vsel %vm1364, %v1360, inf
        %1366 = vmin.xlane.f32.xlu0 %v1365
        %v1367 = vpop.xlane.xlu0 %1366
        %v1368 = vcvt.f32.s32 %v1367
        %v1369 = vcvt.f32.s32 %v1363
        %v1370 = vshll.u32 %v1369, 16
        %v1371 = vadd.s32 %v1370, %v1368
        %v1372 = vsel %vm665, %v1160, 2147483647
        %v1373 = vand.u32 %v1372, 65535
        %v1374 = vshra.s32 %v1372, 16
        %v1375 = vcvt.s32.f32 %v1373
        %v1376 = vcvt.s32.f32 %v1374
        %1377 = vmin.xlane.f32.xlu0 %v1376
        %v1378 = vpop.xlane.xlu0 %1377
        %vm1379 = vcmp.eq.f32.partialorder %v1376, %v1378
        %v1380 = vsel %vm1379, %v1375, inf
        %1381 = vmin.xlane.f32.xlu0 %v1380
        %v1382 = vpop.xlane.xlu0 %1381
        %v1383 = vcvt.f32.s32 %v1382
        %v1384 = vcvt.f32.s32 %v1378
        %v1385 = vshll.u32 %v1384, 16
        %v1386 = vadd.s32 %v1385, %v1383
        %v1387 = vsel %vm665, %v1161, 2147483647
        %v1388 = vand.u32 %v1387, 65535
        %v1389 = vshra.s32 %v1387, 16
        %v1390 = vcvt.s32.f32 %v1388
        %v1391 = vcvt.s32.f32 %v1389
        %1392 = vmin.xlane.f32.xlu0 %v1391
        %v1393 = vpop.xlane.xlu0 %1392
        %vm1394 = vcmp.eq.f32.partialorder %v1391, %v1393
        %v1395 = vsel %vm1394, %v1390, inf
        %1396 = vmin.xlane.f32.xlu0 %v1395
        %v1397 = vpop.xlane.xlu0 %1396
        %v1398 = vcvt.f32.s32 %v1397
        %v1399 = vcvt.f32.s32 %v1393
        %v1400 = vshll.u32 %v1399, 16
        %v1401 = vadd.s32 %v1400, %v1398
        %vm1402 = vcmp.eq.s32.totalorder %v664, %v1176
        %vm1403 = vcmp.eq.s32.totalorder %v664, %v1191
        %vm1404 = vcmp.eq.s32.totalorder %v664, %v1206
        %vm1405 = vcmp.eq.s32.totalorder %v664, %v1221
        %vm1406 = vcmp.eq.s32.totalorder %v664, %v1236
        %vm1407 = vcmp.eq.s32.totalorder %v664, %v1251
        %vm1408 = vcmp.eq.s32.totalorder %v664, %v1266
        %vm1409 = vcmp.eq.s32.totalorder %v664, %v1281
        %vm1410 = vcmp.eq.s32.totalorder %v664, %v1296
        %vm1411 = vcmp.eq.s32.totalorder %v664, %v1311
        %vm1412 = vcmp.eq.s32.totalorder %v664, %v1326
        %vm1413 = vcmp.eq.s32.totalorder %v664, %v1341
        %vm1414 = vcmp.eq.s32.totalorder %v664, %v1356
        %vm1415 = vcmp.eq.s32.totalorder %v664, %v1371
        %vm1416 = vcmp.eq.s32.totalorder %v664, %v1386
        %vm1417 = vcmp.eq.s32.totalorder %v664, %v1401
        %v1418 = vadd.f32 %v1084, 1e-08
        %v1419 = vadd.f32 %v1087, 1e-08
        %v1420 = vadd.f32 %v1090, 1e-08
        %v1421 = vadd.f32 %v1093, 1e-08
        %v1422 = vadd.f32 %v1096, 1e-08
        %v1423 = vadd.f32 %v1099, 1e-08
        %v1424 = vadd.f32 %v1102, 1e-08
        %v1425 = vadd.f32 %v1105, 1e-08
        %v1426 = vadd.f32 %v1108, 1e-08
        %v1427 = vadd.f32 %v1111, 1e-08
        %v1428 = vadd.f32 %v1114, 1e-08
        %v1429 = vadd.f32 %v1117, 1e-08
        %v1430 = vadd.f32 %v1120, 1e-08
        %v1431 = vadd.f32 %v1123, 1e-08
        %v1432 = vadd.f32 %v1126, 1e-08
        %v1433 = vadd.f32 %v1129, 1e-08
        %v1434 = vrcp.pop %v1418
        %v1435 = vrcp.pop %v1419
        %v1436 = vrcp.pop %v1420
        %v1437 = vrcp.pop %v1421
        %v1438 = vrcp.pop %v1422
        %v1439 = vrcp.pop %v1423
        %v1440 = vrcp.pop %v1424
        %v1441 = vrcp.pop %v1425
        %v1442 = vrcp.pop %v1426
        %v1443 = vrcp.pop %v1427
        %v1444 = vrcp.pop %v1428
        %v1445 = vrcp.pop %v1429
        %v1446 = vrcp.pop %v1430
        %v1447 = vrcp.pop %v1431
        %v1448 = vrcp.pop %v1432
        %v1449 = vrcp.pop %v1433
        %v1450 = vsel %vm1402, %v1434, %v1034
        %v1451 = vsel %vm1403, %v1435, %v1035
        %v1452 = vsel %vm1404, %v1436, %v1036
        %v1453 = vsel %vm1405, %v1437, %v1037
        %v1454 = vsel %vm1406, %v1438, %v1038
        %v1455 = vsel %vm1407, %v1439, %v1039
        %v1456 = vsel %vm1408, %v1440, %v1040
        %v1457 = vsel %vm1409, %v1441, %v1041
        %v1458 = vsel %vm1410, %v1442, %v1042
        %v1459 = vsel %vm1411, %v1443, %v1043
        %v1460 = vsel %vm1412, %v1444, %v1044
        %v1461 = vsel %vm1413, %v1445, %v1045
        %v1462 = vsel %vm1414, %v1446, %v1046
        %v1463 = vsel %vm1415, %v1447, %v1047
        %v1464 = vsel %vm1416, %v1448, %v1048
        %v1465 = vsel %vm1417, %v1449, %v1049
        %v1466 = vadd.f32 %v1050, %v1434
        %v1467 = vadd.f32 %v1051, %v1435
        %v1468 = vadd.f32 %v1052, %v1436
        %v1469 = vadd.f32 %v1053, %v1437
        %v1470 = vadd.f32 %v1054, %v1438
        %v1471 = vadd.f32 %v1055, %v1439
        %v1472 = vadd.f32 %v1056, %v1440
        %v1473 = vadd.f32 %v1057, %v1441
        %v1474 = vadd.f32 %v1058, %v1442
        %v1475 = vadd.f32 %v1059, %v1443
        %v1476 = vadd.f32 %v1060, %v1444
        %v1477 = vadd.f32 %v1061, %v1445
        %v1478 = vadd.f32 %v1062, %v1446
        %v1479 = vadd.f32 %v1063, %v1447
        %v1480 = vadd.f32 %v1064, %v1448
        %v1481 = vadd.f32 %v1065, %v1449
        %v1482 = vsel %vm1402, inf, %v1066
        %v1483 = vsel %vm1403, inf, %v1067
        %v1484 = vsel %vm1404, inf, %v1068
        %v1485 = vsel %vm1405, inf, %v1069
        %v1486 = vsel %vm1406, inf, %v1070
        %v1487 = vsel %vm1407, inf, %v1071
        %v1488 = vsel %vm1408, inf, %v1072
        %v1489 = vsel %vm1409, inf, %v1073
        %v1490 = vsel %vm1410, inf, %v1074
        %v1491 = vsel %vm1411, inf, %v1075
        %v1492 = vsel %vm1412, inf, %v1076
        %v1493 = vsel %vm1413, inf, %v1077
        %v1494 = vsel %vm1414, inf, %v1078
        %v1495 = vsel %vm1415, inf, %v1079
        %v1496 = vsel %vm1416, inf, %v1080
        %v1497 = vsel %vm1417, inf, %v1081
        %v1498 = vsel %vm665, %v1482, inf
        %1499 = vmin.xlane.f32.xlu0 %v1498
        %v1500 = vpop.xlane.xlu0 %1499
        %v1501 = vsel %vm665, %v1483, inf
        %1502 = vmin.xlane.f32.xlu0 %v1501
        %v1503 = vpop.xlane.xlu0 %1502
        %v1504 = vsel %vm665, %v1484, inf
        %1505 = vmin.xlane.f32.xlu0 %v1504
        %v1506 = vpop.xlane.xlu0 %1505
        %v1507 = vsel %vm665, %v1485, inf
        %1508 = vmin.xlane.f32.xlu0 %v1507
        %v1509 = vpop.xlane.xlu0 %1508
        %v1510 = vsel %vm665, %v1486, inf
        %1511 = vmin.xlane.f32.xlu0 %v1510
        %v1512 = vpop.xlane.xlu0 %1511
        %v1513 = vsel %vm665, %v1487, inf
        %1514 = vmin.xlane.f32.xlu0 %v1513
        %v1515 = vpop.xlane.xlu0 %1514
        %v1516 = vsel %vm665, %v1488, inf
        %1517 = vmin.xlane.f32.xlu0 %v1516
        %v1518 = vpop.xlane.xlu0 %1517
        %v1519 = vsel %vm665, %v1489, inf
        %1520 = vmin.xlane.f32.xlu0 %v1519
        %v1521 = vpop.xlane.xlu0 %1520
        %v1522 = vsel %vm665, %v1490, inf
        %1523 = vmin.xlane.f32.xlu0 %v1522
        %v1524 = vpop.xlane.xlu0 %1523
        %v1525 = vsel %vm665, %v1491, inf
        %1526 = vmin.xlane.f32.xlu0 %v1525
        %v1527 = vpop.xlane.xlu0 %1526
        %v1528 = vsel %vm665, %v1492, inf
        %1529 = vmin.xlane.f32.xlu0 %v1528
        %v1530 = vpop.xlane.xlu0 %1529
        %v1531 = vsel %vm665, %v1493, inf
        %1532 = vmin.xlane.f32.xlu0 %v1531
        %v1533 = vpop.xlane.xlu0 %1532
        %v1534 = vsel %vm665, %v1494, inf
        %1535 = vmin.xlane.f32.xlu0 %v1534
        %v1536 = vpop.xlane.xlu0 %1535
        %v1537 = vsel %vm665, %v1495, inf
        %1538 = vmin.xlane.f32.xlu0 %v1537
        %v1539 = vpop.xlane.xlu0 %1538
        %v1540 = vsel %vm665, %v1496, inf
        %1541 = vmin.xlane.f32.xlu0 %v1540
        %v1542 = vpop.xlane.xlu0 %1541
        %v1543 = vsel %vm665, %v1497, inf
        %1544 = vmin.xlane.f32.xlu0 %v1543
        %v1545 = vpop.xlane.xlu0 %1544
        %vm1546 = vcmp.eq.f32.partialorder %v1482, %v1500
        %vm1547 = vcmp.eq.f32.partialorder %v1483, %v1503
        %vm1548 = vcmp.eq.f32.partialorder %v1484, %v1506
        %vm1549 = vcmp.eq.f32.partialorder %v1485, %v1509
        %vm1550 = vcmp.eq.f32.partialorder %v1486, %v1512
        %vm1551 = vcmp.eq.f32.partialorder %v1487, %v1515
        %vm1552 = vcmp.eq.f32.partialorder %v1488, %v1518
        %vm1553 = vcmp.eq.f32.partialorder %v1489, %v1521
        %vm1554 = vcmp.eq.f32.partialorder %v1490, %v1524
        %vm1555 = vcmp.eq.f32.partialorder %v1491, %v1527
        %vm1556 = vcmp.eq.f32.partialorder %v1492, %v1530
        %vm1557 = vcmp.eq.f32.partialorder %v1493, %v1533
        %vm1558 = vcmp.eq.f32.partialorder %v1494, %v1536
        %vm1559 = vcmp.eq.f32.partialorder %v1495, %v1539
        %vm1560 = vcmp.eq.f32.partialorder %v1496, %v1542
        %vm1561 = vcmp.eq.f32.partialorder %v1497, %v1545
        %v1562 = vsel %vm1546, %v664, 16
        %v1563 = vsel %vm1547, %v664, 16
        %v1564 = vsel %vm1548, %v664, 16
        %v1565 = vsel %vm1549, %v664, 16
        %v1566 = vsel %vm1550, %v664, 16
        %v1567 = vsel %vm1551, %v664, 16
        %v1568 = vsel %vm1552, %v664, 16
        %v1569 = vsel %vm1553, %v664, 16
        %v1570 = vsel %vm1554, %v664, 16
        %v1571 = vsel %vm1555, %v664, 16
        %v1572 = vsel %vm1556, %v664, 16
        %v1573 = vsel %vm1557, %v664, 16
        %v1574 = vsel %vm1558, %v664, 16
        %v1575 = vsel %vm1559, %v664, 16
        %v1576 = vsel %vm1560, %v664, 16
        %v1577 = vsel %vm1561, %v664, 16
        %v1578 = vsel %vm665, %v1562, 2147483647
        %v1579 = vand.u32 %v1578, 65535
        %v1580 = vshra.s32 %v1578, 16
        %v1581 = vcvt.s32.f32 %v1579
        %v1582 = vcvt.s32.f32 %v1580
        %1583 = vmin.xlane.f32.xlu0 %v1582
        %v1584 = vpop.xlane.xlu0 %1583
        %vm1585 = vcmp.eq.f32.partialorder %v1582, %v1584
        %v1586 = vsel %vm1585, %v1581, inf
        %1587 = vmin.xlane.f32.xlu0 %v1586
        %v1588 = vpop.xlane.xlu0 %1587
        %v1589 = vcvt.f32.s32 %v1588
        %v1590 = vcvt.f32.s32 %v1584
        %v1591 = vshll.u32 %v1590, 16
        %v1592 = vadd.s32 %v1591, %v1589
        %v1593 = vsel %vm665, %v1563, 2147483647
        %v1594 = vand.u32 %v1593, 65535
        %v1595 = vshra.s32 %v1593, 16
        %v1596 = vcvt.s32.f32 %v1594
        %v1597 = vcvt.s32.f32 %v1595
        %1598 = vmin.xlane.f32.xlu0 %v1597
        %v1599 = vpop.xlane.xlu0 %1598
        %vm1600 = vcmp.eq.f32.partialorder %v1597, %v1599
        %v1601 = vsel %vm1600, %v1596, inf
        %1602 = vmin.xlane.f32.xlu0 %v1601
        %v1603 = vpop.xlane.xlu0 %1602
        %v1604 = vcvt.f32.s32 %v1603
        %v1605 = vcvt.f32.s32 %v1599
        %v1606 = vshll.u32 %v1605, 16
        %v1607 = vadd.s32 %v1606, %v1604
        %v1608 = vsel %vm665, %v1564, 2147483647
        %v1609 = vand.u32 %v1608, 65535
        %v1610 = vshra.s32 %v1608, 16
        %v1611 = vcvt.s32.f32 %v1609
        %v1612 = vcvt.s32.f32 %v1610
        %1613 = vmin.xlane.f32.xlu0 %v1612
        %v1614 = vpop.xlane.xlu0 %1613
        %vm1615 = vcmp.eq.f32.partialorder %v1612, %v1614
        %v1616 = vsel %vm1615, %v1611, inf
        %1617 = vmin.xlane.f32.xlu0 %v1616
        %v1618 = vpop.xlane.xlu0 %1617
        %v1619 = vcvt.f32.s32 %v1618
        %v1620 = vcvt.f32.s32 %v1614
        %v1621 = vshll.u32 %v1620, 16
        %v1622 = vadd.s32 %v1621, %v1619
        %v1623 = vsel %vm665, %v1565, 2147483647
        %v1624 = vand.u32 %v1623, 65535
        %v1625 = vshra.s32 %v1623, 16
        %v1626 = vcvt.s32.f32 %v1624
        %v1627 = vcvt.s32.f32 %v1625
        %1628 = vmin.xlane.f32.xlu0 %v1627
        %v1629 = vpop.xlane.xlu0 %1628
        %vm1630 = vcmp.eq.f32.partialorder %v1627, %v1629
        %v1631 = vsel %vm1630, %v1626, inf
        %1632 = vmin.xlane.f32.xlu0 %v1631
        %v1633 = vpop.xlane.xlu0 %1632
        %v1634 = vcvt.f32.s32 %v1633
        %v1635 = vcvt.f32.s32 %v1629
        %v1636 = vshll.u32 %v1635, 16
        %v1637 = vadd.s32 %v1636, %v1634
        %v1638 = vsel %vm665, %v1566, 2147483647
        %v1639 = vand.u32 %v1638, 65535
        %v1640 = vshra.s32 %v1638, 16
        %v1641 = vcvt.s32.f32 %v1639
        %v1642 = vcvt.s32.f32 %v1640
        %1643 = vmin.xlane.f32.xlu0 %v1642
        %v1644 = vpop.xlane.xlu0 %1643
        %vm1645 = vcmp.eq.f32.partialorder %v1642, %v1644
        %v1646 = vsel %vm1645, %v1641, inf
        %1647 = vmin.xlane.f32.xlu0 %v1646
        %v1648 = vpop.xlane.xlu0 %1647
        %v1649 = vcvt.f32.s32 %v1648
        %v1650 = vcvt.f32.s32 %v1644
        %v1651 = vshll.u32 %v1650, 16
        %v1652 = vadd.s32 %v1651, %v1649
        %v1653 = vsel %vm665, %v1567, 2147483647
        %v1654 = vand.u32 %v1653, 65535
        %v1655 = vshra.s32 %v1653, 16
        %v1656 = vcvt.s32.f32 %v1654
        %v1657 = vcvt.s32.f32 %v1655
        %1658 = vmin.xlane.f32.xlu0 %v1657
        %v1659 = vpop.xlane.xlu0 %1658
        %vm1660 = vcmp.eq.f32.partialorder %v1657, %v1659
        %v1661 = vsel %vm1660, %v1656, inf
        %1662 = vmin.xlane.f32.xlu0 %v1661
        %v1663 = vpop.xlane.xlu0 %1662
        %v1664 = vcvt.f32.s32 %v1663
        %v1665 = vcvt.f32.s32 %v1659
        %v1666 = vshll.u32 %v1665, 16
        %v1667 = vadd.s32 %v1666, %v1664
        %v1668 = vsel %vm665, %v1568, 2147483647
        %v1669 = vand.u32 %v1668, 65535
        %v1670 = vshra.s32 %v1668, 16
        %v1671 = vcvt.s32.f32 %v1669
        %v1672 = vcvt.s32.f32 %v1670
        %1673 = vmin.xlane.f32.xlu0 %v1672
        %v1674 = vpop.xlane.xlu0 %1673
        %vm1675 = vcmp.eq.f32.partialorder %v1672, %v1674
        %v1676 = vsel %vm1675, %v1671, inf
        %1677 = vmin.xlane.f32.xlu0 %v1676
        %v1678 = vpop.xlane.xlu0 %1677
        %v1679 = vcvt.f32.s32 %v1678
        %v1680 = vcvt.f32.s32 %v1674
        %v1681 = vshll.u32 %v1680, 16
        %v1682 = vadd.s32 %v1681, %v1679
        %v1683 = vsel %vm665, %v1569, 2147483647
        %v1684 = vand.u32 %v1683, 65535
        %v1685 = vshra.s32 %v1683, 16
        %v1686 = vcvt.s32.f32 %v1684
        %v1687 = vcvt.s32.f32 %v1685
        %1688 = vmin.xlane.f32.xlu0 %v1687
        %v1689 = vpop.xlane.xlu0 %1688
        %vm1690 = vcmp.eq.f32.partialorder %v1687, %v1689
        %v1691 = vsel %vm1690, %v1686, inf
        %1692 = vmin.xlane.f32.xlu0 %v1691
        %v1693 = vpop.xlane.xlu0 %1692
        %v1694 = vcvt.f32.s32 %v1693
        %v1695 = vcvt.f32.s32 %v1689
        %v1696 = vshll.u32 %v1695, 16
        %v1697 = vadd.s32 %v1696, %v1694
        %v1698 = vsel %vm665, %v1570, 2147483647
        %v1699 = vand.u32 %v1698, 65535
        %v1700 = vshra.s32 %v1698, 16
        %v1701 = vcvt.s32.f32 %v1699
        %v1702 = vcvt.s32.f32 %v1700
        %1703 = vmin.xlane.f32.xlu0 %v1702
        %v1704 = vpop.xlane.xlu0 %1703
        %vm1705 = vcmp.eq.f32.partialorder %v1702, %v1704
        %v1706 = vsel %vm1705, %v1701, inf
        %1707 = vmin.xlane.f32.xlu0 %v1706
        %v1708 = vpop.xlane.xlu0 %1707
        %v1709 = vcvt.f32.s32 %v1708
        %v1710 = vcvt.f32.s32 %v1704
        %v1711 = vshll.u32 %v1710, 16
        %v1712 = vadd.s32 %v1711, %v1709
        %v1713 = vsel %vm665, %v1571, 2147483647
        %v1714 = vand.u32 %v1713, 65535
        %v1715 = vshra.s32 %v1713, 16
        %v1716 = vcvt.s32.f32 %v1714
        %v1717 = vcvt.s32.f32 %v1715
        %1718 = vmin.xlane.f32.xlu0 %v1717
        %v1719 = vpop.xlane.xlu0 %1718
        %vm1720 = vcmp.eq.f32.partialorder %v1717, %v1719
        %v1721 = vsel %vm1720, %v1716, inf
        %1722 = vmin.xlane.f32.xlu0 %v1721
        %v1723 = vpop.xlane.xlu0 %1722
        %v1724 = vcvt.f32.s32 %v1723
        %v1725 = vcvt.f32.s32 %v1719
        %v1726 = vshll.u32 %v1725, 16
        %v1727 = vadd.s32 %v1726, %v1724
        %v1728 = vsel %vm665, %v1572, 2147483647
        %v1729 = vand.u32 %v1728, 65535
        %v1730 = vshra.s32 %v1728, 16
        %v1731 = vcvt.s32.f32 %v1729
        %v1732 = vcvt.s32.f32 %v1730
        %1733 = vmin.xlane.f32.xlu0 %v1732
        %v1734 = vpop.xlane.xlu0 %1733
        %vm1735 = vcmp.eq.f32.partialorder %v1732, %v1734
        %v1736 = vsel %vm1735, %v1731, inf
        %1737 = vmin.xlane.f32.xlu0 %v1736
        %v1738 = vpop.xlane.xlu0 %1737
        %v1739 = vcvt.f32.s32 %v1738
        %v1740 = vcvt.f32.s32 %v1734
        %v1741 = vshll.u32 %v1740, 16
        %v1742 = vadd.s32 %v1741, %v1739
        %v1743 = vsel %vm665, %v1573, 2147483647
        %v1744 = vand.u32 %v1743, 65535
        %v1745 = vshra.s32 %v1743, 16
        %v1746 = vcvt.s32.f32 %v1744
        %v1747 = vcvt.s32.f32 %v1745
        %1748 = vmin.xlane.f32.xlu0 %v1747
        %v1749 = vpop.xlane.xlu0 %1748
        %vm1750 = vcmp.eq.f32.partialorder %v1747, %v1749
        %v1751 = vsel %vm1750, %v1746, inf
        %1752 = vmin.xlane.f32.xlu0 %v1751
        %v1753 = vpop.xlane.xlu0 %1752
        %v1754 = vcvt.f32.s32 %v1753
        %v1755 = vcvt.f32.s32 %v1749
        %v1756 = vshll.u32 %v1755, 16
        %v1757 = vadd.s32 %v1756, %v1754
        %v1758 = vsel %vm665, %v1574, 2147483647
        %v1759 = vand.u32 %v1758, 65535
        %v1760 = vshra.s32 %v1758, 16
        %v1761 = vcvt.s32.f32 %v1759
        %v1762 = vcvt.s32.f32 %v1760
        %1763 = vmin.xlane.f32.xlu0 %v1762
        %v1764 = vpop.xlane.xlu0 %1763
        %vm1765 = vcmp.eq.f32.partialorder %v1762, %v1764
        %v1766 = vsel %vm1765, %v1761, inf
        %1767 = vmin.xlane.f32.xlu0 %v1766
        %v1768 = vpop.xlane.xlu0 %1767
        %v1769 = vcvt.f32.s32 %v1768
        %v1770 = vcvt.f32.s32 %v1764
        %v1771 = vshll.u32 %v1770, 16
        %v1772 = vadd.s32 %v1771, %v1769
        %v1773 = vsel %vm665, %v1575, 2147483647
        %v1774 = vand.u32 %v1773, 65535
        %v1775 = vshra.s32 %v1773, 16
        %v1776 = vcvt.s32.f32 %v1774
        %v1777 = vcvt.s32.f32 %v1775
        %1778 = vmin.xlane.f32.xlu0 %v1777
        %v1779 = vpop.xlane.xlu0 %1778
        %vm1780 = vcmp.eq.f32.partialorder %v1777, %v1779
        %v1781 = vsel %vm1780, %v1776, inf
        %1782 = vmin.xlane.f32.xlu0 %v1781
        %v1783 = vpop.xlane.xlu0 %1782
        %v1784 = vcvt.f32.s32 %v1783
        %v1785 = vcvt.f32.s32 %v1779
        %v1786 = vshll.u32 %v1785, 16
        %v1787 = vadd.s32 %v1786, %v1784
        %v1788 = vsel %vm665, %v1576, 2147483647
        %v1789 = vand.u32 %v1788, 65535
        %v1790 = vshra.s32 %v1788, 16
        %v1791 = vcvt.s32.f32 %v1789
        %v1792 = vcvt.s32.f32 %v1790
        %1793 = vmin.xlane.f32.xlu0 %v1792
        %v1794 = vpop.xlane.xlu0 %1793
        %vm1795 = vcmp.eq.f32.partialorder %v1792, %v1794
        %v1796 = vsel %vm1795, %v1791, inf
        %1797 = vmin.xlane.f32.xlu0 %v1796
        %v1798 = vpop.xlane.xlu0 %1797
        %v1799 = vcvt.f32.s32 %v1798
        %v1800 = vcvt.f32.s32 %v1794
        %v1801 = vshll.u32 %v1800, 16
        %v1802 = vadd.s32 %v1801, %v1799
        %v1803 = vsel %vm665, %v1577, 2147483647
        %v1804 = vand.u32 %v1803, 65535
        %v1805 = vshra.s32 %v1803, 16
        %v1806 = vcvt.s32.f32 %v1804
        %v1807 = vcvt.s32.f32 %v1805
        %1808 = vmin.xlane.f32.xlu0 %v1807
        %v1809 = vpop.xlane.xlu0 %1808
        %vm1810 = vcmp.eq.f32.partialorder %v1807, %v1809
        %v1811 = vsel %vm1810, %v1806, inf
        %1812 = vmin.xlane.f32.xlu0 %v1811
        %v1813 = vpop.xlane.xlu0 %1812
        %v1814 = vcvt.f32.s32 %v1813
        %v1815 = vcvt.f32.s32 %v1809
        %v1816 = vshll.u32 %v1815, 16
        %v1817 = vadd.s32 %v1816, %v1814
        %vm1818 = vcmp.eq.s32.totalorder %v664, %v1592
        %vm1819 = vcmp.eq.s32.totalorder %v664, %v1607
        %vm1820 = vcmp.eq.s32.totalorder %v664, %v1622
        %vm1821 = vcmp.eq.s32.totalorder %v664, %v1637
        %vm1822 = vcmp.eq.s32.totalorder %v664, %v1652
        %vm1823 = vcmp.eq.s32.totalorder %v664, %v1667
        %vm1824 = vcmp.eq.s32.totalorder %v664, %v1682
        %vm1825 = vcmp.eq.s32.totalorder %v664, %v1697
        %vm1826 = vcmp.eq.s32.totalorder %v664, %v1712
        %vm1827 = vcmp.eq.s32.totalorder %v664, %v1727
        %vm1828 = vcmp.eq.s32.totalorder %v664, %v1742
        %vm1829 = vcmp.eq.s32.totalorder %v664, %v1757
        %vm1830 = vcmp.eq.s32.totalorder %v664, %v1772
        %vm1831 = vcmp.eq.s32.totalorder %v664, %v1787
        %vm1832 = vcmp.eq.s32.totalorder %v664, %v1802
        %vm1833 = vcmp.eq.s32.totalorder %v664, %v1817
        %v1834 = vadd.f32 %v1500, 1e-08
        %v1835 = vadd.f32 %v1503, 1e-08
        %v1836 = vadd.f32 %v1506, 1e-08
        %v1837 = vadd.f32 %v1509, 1e-08
        %v1838 = vadd.f32 %v1512, 1e-08
        %v1839 = vadd.f32 %v1515, 1e-08
        %v1840 = vadd.f32 %v1518, 1e-08
        %v1841 = vadd.f32 %v1521, 1e-08
        %v1842 = vadd.f32 %v1524, 1e-08
        %v1843 = vadd.f32 %v1527, 1e-08
        %v1844 = vadd.f32 %v1530, 1e-08
        %v1845 = vadd.f32 %v1533, 1e-08
        %v1846 = vadd.f32 %v1536, 1e-08
        %v1847 = vadd.f32 %v1539, 1e-08
        %v1848 = vadd.f32 %v1542, 1e-08
        %v1849 = vadd.f32 %v1545, 1e-08
        %v1850 = vrcp.pop %v1834
        %v1851 = vrcp.pop %v1835
        %v1852 = vrcp.pop %v1836
        %v1853 = vrcp.pop %v1837
        %v1854 = vrcp.pop %v1838
        %v1855 = vrcp.pop %v1839
        %v1856 = vrcp.pop %v1840
        %v1857 = vrcp.pop %v1841
        %v1858 = vrcp.pop %v1842
        %v1859 = vrcp.pop %v1843
        %v1860 = vrcp.pop %v1844
        %v1861 = vrcp.pop %v1845
        %v1862 = vrcp.pop %v1846
        %v1863 = vrcp.pop %v1847
        %v1864 = vrcp.pop %v1848
        %v1865 = vrcp.pop %v1849
        %v1866 = vsel %vm1818, %v1850, %v1450
        %v1867 = vsel %vm1819, %v1851, %v1451
        %v1868 = vsel %vm1820, %v1852, %v1452
        %v1869 = vsel %vm1821, %v1853, %v1453
        %v1870 = vsel %vm1822, %v1854, %v1454
        %v1871 = vsel %vm1823, %v1855, %v1455
        %v1872 = vsel %vm1824, %v1856, %v1456
        %v1873 = vsel %vm1825, %v1857, %v1457
        %v1874 = vsel %vm1826, %v1858, %v1458
        %v1875 = vsel %vm1827, %v1859, %v1459
        %v1876 = vsel %vm1828, %v1860, %v1460
        %v1877 = vsel %vm1829, %v1861, %v1461
        %v1878 = vsel %vm1830, %v1862, %v1462
        %v1879 = vsel %vm1831, %v1863, %v1463
        %v1880 = vsel %vm1832, %v1864, %v1464
        %v1881 = vsel %vm1833, %v1865, %v1465
        %v1882 = vadd.f32 %v1466, %v1850
        %v1883 = vadd.f32 %v1467, %v1851
        %v1884 = vadd.f32 %v1468, %v1852
        %v1885 = vadd.f32 %v1469, %v1853
        %v1886 = vadd.f32 %v1470, %v1854
        %v1887 = vadd.f32 %v1471, %v1855
        %v1888 = vadd.f32 %v1472, %v1856
        %v1889 = vadd.f32 %v1473, %v1857
        %v1890 = vadd.f32 %v1474, %v1858
        %v1891 = vadd.f32 %v1475, %v1859
        %v1892 = vadd.f32 %v1476, %v1860
        %v1893 = vadd.f32 %v1477, %v1861
        %v1894 = vadd.f32 %v1478, %v1862
        %v1895 = vadd.f32 %v1479, %v1863
        %v1896 = vadd.f32 %v1480, %v1864
        %v1897 = vadd.f32 %v1481, %v1865
        %v1898 = vrcp.pop %v1882
        %v1899 = vrcp.pop %v1883
        %v1900 = vrcp.pop %v1884
        %v1901 = vrcp.pop %v1885
        %v1902 = vrcp.pop %v1886
        %v1903 = vrcp.pop %v1887
        %v1904 = vrcp.pop %v1888
        %v1905 = vrcp.pop %v1889
        %v1906 = vrcp.pop %v1890
        %v1907 = vrcp.pop %v1891
        %v1908 = vrcp.pop %v1892
        %v1909 = vrcp.pop %v1893
        %v1910 = vrcp.pop %v1894
        %v1911 = vrcp.pop %v1895
        %v1912 = vrcp.pop %v1896
        %v1913 = vrcp.pop %v1897
        %v1914 = vmul.f32 %v1866, %v1898
        %v1915 = vmul.f32 %v1867, %v1899
        %v1916 = vmul.f32 %v1868, %v1900
        %v1917 = vmul.f32 %v1869, %v1901
        %v1918 = vmul.f32 %v1870, %v1902
        %v1919 = vmul.f32 %v1871, %v1903
        %v1920 = vmul.f32 %v1872, %v1904
        %v1921 = vmul.f32 %v1873, %v1905
        %v1922 = vmul.f32 %v1874, %v1906
        %v1923 = vmul.f32 %v1875, %v1907
        %v1924 = vmul.f32 %v1876, %v1908
        %v1925 = vmul.f32 %v1877, %v1909
        %v1926 = vmul.f32 %v1878, %v1910
        %v1927 = vmul.f32 %v1879, %v1911
        %v1928 = vmul.f32 %v1880, %v1912
        %v1929 = vmul.f32 %v1881, %v1913
        %v1931 = vsel %vm665, %v1914, 0
        %v1934 = vsel %vm665, %v1915, 0
        %v1937 = vsel %vm665, %v1916, 0
        %v1940 = vsel %vm665, %v1917, 0
        %v1943 = vsel %vm665, %v1918, 0
        %v1946 = vsel %vm665, %v1919, 0
        %v1949 = vsel %vm665, %v1920, 0
        %v1952 = vsel %vm665, %v1921, 0
        %v1955 = vsel %vm665, %v1922, 0
        %v1958 = vsel %vm665, %v1923, 0
        %v1961 = vsel %vm665, %v1924, 0
        %v1964 = vsel %vm665, %v1925, 0
        %v1967 = vsel %vm665, %v1926, 0
        %v1970 = vsel %vm665, %v1927, 0
        %v1973 = vsel %vm665, %v1928, 0
        %v1976 = vsel %vm665, %v1929, 0
        %1978 = vmatprep.subr.mxu0 0.0
        %1979 = vmatpush1.msra.mxu0 %v451
        %1980 = vmatprep.subr.mxu0 0.0
        %1981 = vmatpush1.msra.mxu0 %v452
        %1982 = vmatprep.subr.mxu0 0.0
        %1983 = vmatpush1.msra.mxu0 0.0
        %1984 = vmatprep.subr.mxu0 0.0
        %1985 = vmatpush1.msra.mxu0 0.0
        %1986 = vmatprep.subr.mxu0 0.0
        %1987 = vmatpush1.msra.mxu0 0.0
        %1988 = vmatprep.subr.mxu0 0.0
        %1989 = vmatpush1.msra.mxu0 0.0
        %1990 = vmatprep.subr.mxu0 0.0
        %1991 = vmatpush1.msra.mxu0 0.0
        %1992 = vmatprep.subr.mxu0 0.0
        %1993 = vmatpush1.msra.mxu0 0.0
        %1994 = vmatprep.subr.mxu0 0.0
        %1995 = vmatpush1.msra.mxu0 0.0
        %1996 = vmatprep.subr.mxu0 0.0
        %1997 = vmatpush1.msra.mxu0 0.0
        %1998 = vmatprep.subr.mxu0 0.0
        %1999 = vmatpush1.msra.mxu0 0.0
        %2000 = vmatprep.subr.mxu0 0.0
        %2001 = vmatpush1.msra.mxu0 0.0
        %2002 = vmatprep.subr.mxu0 0.0
        %2003 = vmatpush1.msra.mxu0 0.0
        %2004 = vmatprep.subr.mxu0 0.0
        %2005 = vmatpush1.msra.mxu0 0.0
        %2006 = vmatprep.subr.mxu0 0.0
        %2007 = vmatpush1.msra.mxu0 0.0
        %2008 = vmatprep.subr.mxu0 0.0
        %2009 = vmatpush1.msra.mxu0 0.0
        %2010 = vmatprep.subr.mxu0 0.0
        %2011 = vmatpush1.msra.mxu0 0.0
        %2012 = vmatprep.subr.mxu0 0.0
        %2013 = vmatpush1.msra.mxu0 0.0
        %2014 = vmatprep.subr.mxu0 0.0
        %2015 = vmatpush1.msra.mxu0 0.0
        %2016 = vmatprep.subr.mxu0 0.0
        %2017 = vmatpush1.msra.mxu0 0.0
        %2018 = vmatprep.subr.mxu0 0.0
        %2019 = vmatpush1.msra.mxu0 0.0
        %2020 = vmatprep.subr.mxu0 0.0
        %2021 = vmatpush1.msra.mxu0 0.0
        %2022 = vmatprep.subr.mxu0 0.0
        %2023 = vmatpush1.msra.mxu0 0.0
        %2024 = vmatprep.subr.mxu0 0.0
        %2025 = vmatpush1.msra.mxu0 0.0
        %2026 = vmatprep.subr.mxu0 0.0
        %2027 = vmatpush1.msra.mxu0 0.0
        %2028 = vmatprep.subr.mxu0 0.0
        %2029 = vmatpush1.msra.mxu0 0.0
        %2030 = vmatprep.subr.mxu0 0.0
        %2031 = vmatpush1.msra.mxu0 0.0
        %2032 = vmatprep.subr.mxu0 0.0
        %2033 = vmatpush1.msra.mxu0 0.0
        %2034 = vmatprep.subr.mxu0 0.0
        %2035 = vmatpush1.msra.mxu0 0.0
        %2036 = vmatprep.subr.mxu0 0.0
        %2037 = vmatpush1.msra.mxu0 0.0
        %2038 = vmatprep.subr.mxu0 0.0
        %2039 = vmatpush1.msra.mxu0 0.0
        %2040 = vmatprep.subr.mxu0 0.0
        %2041 = vmatpush1.msra.mxu0 0.0
        %2042 = vmatprep.mubr.f32.mxu0 0.0
        %2043 = vmatmul.mubr.f32.gmra.mrb[0].mxu0 %v1931
        %v2044 = vpop.f32.mrb[0].mxu0
        %v2045 = vadd.f32 0.0, %v2044
        %v2046 = vpop.f32.mrb[0].mxu0
        %2047 = vmatprep.mubr.f32.mxu0 0.0
        %2048 = vmatmul.mubr.f32.gmra.mrb[0].mxu0 %v1934
        %v2049 = vpop.f32.mrb[0].mxu0
        %v2050 = vadd.f32 0.0, %v2049
        %v2051 = vpop.f32.mrb[0].mxu0
        %2052 = vmatprep.mubr.f32.mxu0 0.0
        %2053 = vmatmul.mubr.f32.gmra.mrb[0].mxu0 %v1937
        %v2054 = vpop.f32.mrb[0].mxu0
        %v2055 = vadd.f32 0.0, %v2054
        %v2056 = vpop.f32.mrb[0].mxu0
        %2057 = vmatprep.mubr.f32.mxu0 0.0
        %2058 = vmatmul.mubr.f32.gmra.mrb[0].mxu0 %v1940
        %v2059 = vpop.f32.mrb[0].mxu0
        %v2060 = vadd.f32 0.0, %v2059
        %v2061 = vpop.f32.mrb[0].mxu0
        %2062 = vmatprep.mubr.f32.mxu0 0.0
        %2063 = vmatmul.mubr.f32.gmra.mrb[0].mxu0 %v1943
        %v2064 = vpop.f32.mrb[0].mxu0
        %v2065 = vadd.f32 0.0, %v2064
        %v2066 = vpop.f32.mrb[0].mxu0
        %2067 = vmatprep.mubr.f32.mxu0 0.0
        %2068 = vmatmul.mubr.f32.gmra.mrb[0].mxu0 %v1946
        %v2069 = vpop.f32.mrb[0].mxu0
        %v2070 = vadd.f32 0.0, %v2069
        %v2071 = vpop.f32.mrb[0].mxu0
        %2072 = vmatprep.mubr.f32.mxu0 0.0
        %2073 = vmatmul.mubr.f32.gmra.mrb[0].mxu0 %v1949
        %v2074 = vpop.f32.mrb[0].mxu0
        %v2075 = vadd.f32 0.0, %v2074
        %v2076 = vpop.f32.mrb[0].mxu0
        %2077 = vmatprep.mubr.f32.mxu0 0.0
        %2078 = vmatmul.mubr.f32.gmra.mrb[0].mxu0 %v1952
        %v2079 = vpop.f32.mrb[0].mxu0
        %v2080 = vadd.f32 0.0, %v2079
        %v2081 = vpop.f32.mrb[0].mxu0
        %2082 = vmatprep.mubr.f32.mxu0 0.0
        %2083 = vmatmul.mubr.f32.gmra.mrb[0].mxu0 %v1955
        %v2084 = vpop.f32.mrb[0].mxu0
        %v2085 = vadd.f32 0.0, %v2084
        %v2086 = vpop.f32.mrb[0].mxu0
        %2087 = vmatprep.mubr.f32.mxu0 0.0
        %2088 = vmatmul.mubr.f32.gmra.mrb[0].mxu0 %v1958
        %v2089 = vpop.f32.mrb[0].mxu0
        %v2090 = vadd.f32 0.0, %v2089
        %v2091 = vpop.f32.mrb[0].mxu0
        %2092 = vmatprep.mubr.f32.mxu0 0.0
        %2093 = vmatmul.mubr.f32.gmra.mrb[0].mxu0 %v1961
        %v2094 = vpop.f32.mrb[0].mxu0
        %v2095 = vadd.f32 0.0, %v2094
        %v2096 = vpop.f32.mrb[0].mxu0
        %2097 = vmatprep.mubr.f32.mxu0 0.0
        %2098 = vmatmul.mubr.f32.gmra.mrb[0].mxu0 %v1964
        %v2099 = vpop.f32.mrb[0].mxu0
        %v2100 = vadd.f32 0.0, %v2099
        %v2101 = vpop.f32.mrb[0].mxu0
        %2102 = vmatprep.mubr.f32.mxu0 0.0
        %2103 = vmatmul.mubr.f32.gmra.mrb[0].mxu0 %v1967
        %v2104 = vpop.f32.mrb[0].mxu0
        %v2105 = vadd.f32 0.0, %v2104
        %v2106 = vpop.f32.mrb[0].mxu0
        %2107 = vmatprep.mubr.f32.mxu0 0.0
        %2108 = vmatmul.mubr.f32.gmra.mrb[0].mxu0 %v1970
        %v2109 = vpop.f32.mrb[0].mxu0
        %v2110 = vadd.f32 0.0, %v2109
        %v2111 = vpop.f32.mrb[0].mxu0
        %2112 = vmatprep.mubr.f32.mxu0 0.0
        %2113 = vmatmul.mubr.f32.gmra.mrb[0].mxu0 %v1973
        %v2114 = vpop.f32.mrb[0].mxu0
        %v2115 = vadd.f32 0.0, %v2114
        %v2116 = vpop.f32.mrb[0].mxu0
        %2117 = vmatprep.mubr.f32.mxu0 0.0
        %2118 = vmatmul.mubr.f32.gmra.mrb[0].mxu0 %v1976
        %v2119 = vpop.f32.mrb[0].mxu0
        %v2120 = vadd.f32 0.0, %v2119
        %v2121 = vpop.f32.mrb[0].mxu0
        %2122 = vdwg.mxu0
        %v2123 = vld [vmem:[%s427] sm:$0xff]
        %v2124 = vld [vmem:[%s427 + $0x8] sm:$0xff]
        %v2125 = vld [vmem:[%s427 + $0x10] sm:$0xff]
        %v2126 = vld [vmem:[%s427 + $0x18] sm:$0xff]
        %v2127 = vld [vmem:[%s427 + $0x20] sm:$0xff]
        %v2128 = vld [vmem:[%s427 + $0x28] sm:$0xff]
        %v2129 = vld [vmem:[%s427 + $0x30] sm:$0xff]
        %v2130 = vld [vmem:[%s427 + $0x38] sm:$0xff]
        %v2131 = vld [vmem:[%s427 + $0x40] sm:$0xff]
        %v2132 = vld [vmem:[%s427 + $0x48] sm:$0xff]
        %v2133 = vld [vmem:[%s427 + $0x50] sm:$0xff]
        %v2134 = vld [vmem:[%s427 + $0x58] sm:$0xff]
        %v2135 = vld [vmem:[%s427 + $0x60] sm:$0xff]
        %v2136 = vld [vmem:[%s427 + $0x68] sm:$0xff]
        %v2137 = vld [vmem:[%s427 + $0x70] sm:$0xff]
        %v2138 = vld [vmem:[%s427 + $0x78] sm:$0xff]
        %v2139 = vld [vmem:[%s4] sm:$0xff]
        %v2140 = vld [vmem:[%s4 + $0x8] sm:$0xff]
        %v2141 = vld [vmem:[%s5] sm:$0xff]
        %v2142 = vld [vmem:[%s5 + $0x8] sm:$0xff]
        %v2143 = vld [vmem:[%s5 + $0x10] sm:$0xff]
        %v2144 = vld [vmem:[%s5 + $0x18] sm:$0xff]
        %vm2145 = vcmask 261120
        %v2147 = vsel %vm2145, %v2045, 0
        %v2150 = vsel %vm2145, %v2050, 0
        %v2153 = vsel %vm2145, %v2055, 0
        %v2156 = vsel %vm2145, %v2060, 0
        %v2159 = vsel %vm2145, %v2065, 0
        %v2162 = vsel %vm2145, %v2070, 0
        %v2165 = vsel %vm2145, %v2075, 0
        %v2168 = vsel %vm2145, %v2080, 0
        %v2171 = vsel %vm2145, %v2085, 0
        %v2174 = vsel %vm2145, %v2090, 0
        %v2177 = vsel %vm2145, %v2095, 0
        %v2180 = vsel %vm2145, %v2100, 0
        %v2183 = vsel %vm2145, %v2105, 0
        %v2186 = vsel %vm2145, %v2110, 0
        %v2189 = vsel %vm2145, %v2115, 0
        %v2192 = vsel %vm2145, %v2120, 0
        %2194 = vmatprep.subr.mxu0 0.0
        %2195 = vmatpush1.msra.mxu0 %v2141
        %2196 = vmatprep.subr.mxu0 0.0
        %2197 = vmatpush1.msra.mxu0 %v2142
        %2198 = vmatprep.subr.mxu0 0.0
        %2199 = vmatpush1.msra.mxu0 %v2143
        %2200 = vmatprep.subr.mxu0 0.0
        %2201 = vmatpush1.msra.mxu0 %v2144
        %2202 = vmatprep.subr.mxu0 0.0
        %2203 = vmatpush1.msra.mxu0 0.0
        %2204 = vmatprep.subr.mxu0 0.0
        %2205 = vmatpush1.msra.mxu0 0.0
        %2206 = vmatprep.subr.mxu0 0.0
        %2207 = vmatpush1.msra.mxu0 0.0
        %2208 = vmatprep.subr.mxu0 0.0
        %2209 = vmatpush1.msra.mxu0 0.0
        %2210 = vmatprep.subr.mxu0 0.0
        %2211 = vmatpush1.msra.mxu0 0.0
        %2212 = vmatprep.subr.mxu0 0.0
        %2213 = vmatpush1.msra.mxu0 0.0
        %2214 = vmatprep.subr.mxu0 0.0
        %2215 = vmatpush1.msra.mxu0 0.0
        %2216 = vmatprep.subr.mxu0 0.0
        %2217 = vmatpush1.msra.mxu0 0.0
        %2218 = vmatprep.subr.mxu0 0.0
        %2219 = vmatpush1.msra.mxu0 0.0
        %2220 = vmatprep.subr.mxu0 0.0
        %2221 = vmatpush1.msra.mxu0 0.0
        %2222 = vmatprep.subr.mxu0 0.0
        %2223 = vmatpush1.msra.mxu0 0.0
        %2224 = vmatprep.subr.mxu0 0.0
        %2225 = vmatpush1.msra.mxu0 0.0
        %2226 = vmatprep.subr.mxu0 0.0
        %2227 = vmatpush1.msra.mxu0 0.0
        %2228 = vmatprep.subr.mxu0 0.0
        %2229 = vmatpush1.msra.mxu0 0.0
        %2230 = vmatprep.subr.mxu0 0.0
        %2231 = vmatpush1.msra.mxu0 0.0
        %2232 = vmatprep.subr.mxu0 0.0
        %2233 = vmatpush1.msra.mxu0 0.0
        %2234 = vmatprep.subr.mxu0 0.0
        %2235 = vmatpush1.msra.mxu0 0.0
        %2236 = vmatprep.subr.mxu0 0.0
        %2237 = vmatpush1.msra.mxu0 0.0
        %2238 = vmatprep.subr.mxu0 0.0
        %2239 = vmatpush1.msra.mxu0 0.0
        %2240 = vmatprep.subr.mxu0 0.0
        %2241 = vmatpush1.msra.mxu0 0.0
        %2242 = vmatprep.subr.mxu0 0.0
        %2243 = vmatpush1.msra.mxu0 0.0
        %2244 = vmatprep.subr.mxu0 0.0
        %2245 = vmatpush1.msra.mxu0 0.0
        %2246 = vmatprep.subr.mxu0 0.0
        %2247 = vmatpush1.msra.mxu0 0.0
        %2248 = vmatprep.subr.mxu0 0.0
        %2249 = vmatpush1.msra.mxu0 0.0
        %2250 = vmatprep.subr.mxu0 0.0
        %2251 = vmatpush1.msra.mxu0 0.0
        %2252 = vmatprep.subr.mxu0 0.0
        %2253 = vmatpush1.msra.mxu0 0.0
        %2254 = vmatprep.subr.mxu0 0.0
        %2255 = vmatpush1.msra.mxu0 0.0
        %2256 = vmatprep.subr.mxu0 0.0
        %2257 = vmatpush1.msra.mxu0 0.0
        %2258 = vmatprep.mubr.f32.mxu0 0.0
        %2259 = vmatmul.mubr.f32.gmra.mrb[0].mxu0 %v2147
        %v2260 = vpop.f32.mrb[0].mxu0
        %v2261 = vadd.f32 0.0, %v2260
        %v2262 = vpop.f32.mrb[0].mxu0
        %2263 = vmatprep.mubr.f32.mxu0 0.0
        %2264 = vmatmul.mubr.f32.gmra.mrb[0].mxu0 %v2150
        %v2265 = vpop.f32.mrb[0].mxu0
        %v2266 = vadd.f32 0.0, %v2265
        %v2267 = vpop.f32.mrb[0].mxu0
        %2268 = vmatprep.mubr.f32.mxu0 0.0
        %2269 = vmatmul.mubr.f32.gmra.mrb[0].mxu0 %v2153
        %v2270 = vpop.f32.mrb[0].mxu0
        %v2271 = vadd.f32 0.0, %v2270
        %v2272 = vpop.f32.mrb[0].mxu0
        %2273 = vmatprep.mubr.f32.mxu0 0.0
        %2274 = vmatmul.mubr.f32.gmra.mrb[0].mxu0 %v2156
        %v2275 = vpop.f32.mrb[0].mxu0
        %v2276 = vadd.f32 0.0, %v2275
        %v2277 = vpop.f32.mrb[0].mxu0
        %2278 = vmatprep.mubr.f32.mxu0 0.0
        %2279 = vmatmul.mubr.f32.gmra.mrb[0].mxu0 %v2159
        %v2280 = vpop.f32.mrb[0].mxu0
        %v2281 = vadd.f32 0.0, %v2280
        %v2282 = vpop.f32.mrb[0].mxu0
        %2283 = vmatprep.mubr.f32.mxu0 0.0
        %2284 = vmatmul.mubr.f32.gmra.mrb[0].mxu0 %v2162
        %v2285 = vpop.f32.mrb[0].mxu0
        %v2286 = vadd.f32 0.0, %v2285
        %v2287 = vpop.f32.mrb[0].mxu0
        %2288 = vmatprep.mubr.f32.mxu0 0.0
        %2289 = vmatmul.mubr.f32.gmra.mrb[0].mxu0 %v2165
        %v2290 = vpop.f32.mrb[0].mxu0
        %v2291 = vadd.f32 0.0, %v2290
        %v2292 = vpop.f32.mrb[0].mxu0
        %2293 = vmatprep.mubr.f32.mxu0 0.0
        %2294 = vmatmul.mubr.f32.gmra.mrb[0].mxu0 %v2168
        %v2295 = vpop.f32.mrb[0].mxu0
        %v2296 = vadd.f32 0.0, %v2295
        %v2297 = vpop.f32.mrb[0].mxu0
        %2298 = vmatprep.mubr.f32.mxu0 0.0
        %2299 = vmatmul.mubr.f32.gmra.mrb[0].mxu0 %v2171
        %v2300 = vpop.f32.mrb[0].mxu0
        %v2301 = vadd.f32 0.0, %v2300
        %v2302 = vpop.f32.mrb[0].mxu0
        %2303 = vmatprep.mubr.f32.mxu0 0.0
        %2304 = vmatmul.mubr.f32.gmra.mrb[0].mxu0 %v2174
        %v2305 = vpop.f32.mrb[0].mxu0
        %v2306 = vadd.f32 0.0, %v2305
        %v2307 = vpop.f32.mrb[0].mxu0
        %2308 = vmatprep.mubr.f32.mxu0 0.0
        %2309 = vmatmul.mubr.f32.gmra.mrb[0].mxu0 %v2177
        %v2310 = vpop.f32.mrb[0].mxu0
        %v2311 = vadd.f32 0.0, %v2310
        %v2312 = vpop.f32.mrb[0].mxu0
        %2313 = vmatprep.mubr.f32.mxu0 0.0
        %2314 = vmatmul.mubr.f32.gmra.mrb[0].mxu0 %v2180
        %v2315 = vpop.f32.mrb[0].mxu0
        %v2316 = vadd.f32 0.0, %v2315
        %v2317 = vpop.f32.mrb[0].mxu0
        %2318 = vmatprep.mubr.f32.mxu0 0.0
        %2319 = vmatmul.mubr.f32.gmra.mrb[0].mxu0 %v2183
        %v2320 = vpop.f32.mrb[0].mxu0
        %v2321 = vadd.f32 0.0, %v2320
        %v2322 = vpop.f32.mrb[0].mxu0
        %2323 = vmatprep.mubr.f32.mxu0 0.0
        %2324 = vmatmul.mubr.f32.gmra.mrb[0].mxu0 %v2186
        %v2325 = vpop.f32.mrb[0].mxu0
        %v2326 = vadd.f32 0.0, %v2325
        %v2327 = vpop.f32.mrb[0].mxu0
        %2328 = vmatprep.mubr.f32.mxu0 0.0
        %2329 = vmatmul.mubr.f32.gmra.mrb[0].mxu0 %v2189
        %v2330 = vpop.f32.mrb[0].mxu0
        %v2331 = vadd.f32 0.0, %v2330
        %v2332 = vpop.f32.mrb[0].mxu0
        %2333 = vmatprep.mubr.f32.mxu0 0.0
        %2334 = vmatmul.mubr.f32.gmra.mrb[0].mxu0 %v2192
        %v2335 = vpop.f32.mrb[0].mxu0
        %v2336 = vadd.f32 0.0, %v2335
        %v2337 = vpop.f32.mrb[0].mxu0
        %2338 = vdwg.mxu0
        %v2340 = vsel %vm665, %v2123, 0
        %v2343 = vsel %vm665, %v2124, 0
        %v2346 = vsel %vm665, %v2125, 0
        %v2349 = vsel %vm665, %v2126, 0
        %v2352 = vsel %vm665, %v2127, 0
        %v2355 = vsel %vm665, %v2128, 0
        %v2358 = vsel %vm665, %v2129, 0
        %v2361 = vsel %vm665, %v2130, 0
        %v2364 = vsel %vm665, %v2131, 0
        %v2367 = vsel %vm665, %v2132, 0
        %v2370 = vsel %vm665, %v2133, 0
        %v2373 = vsel %vm665, %v2134, 0
        %v2376 = vsel %vm665, %v2135, 0
        %v2379 = vsel %vm665, %v2136, 0
        %v2382 = vsel %vm665, %v2137, 0
        %v2385 = vsel %vm665, %v2138, 0
        %2387 = vmatprep.subr.mxu0 0.0
        %2388 = vmatpush1.msra.mxu0 %v2139
        %2389 = vmatprep.subr.mxu0 0.0
        %2390 = vmatpush1.msra.mxu0 %v2140
        %2391 = vmatprep.subr.mxu0 0.0
        %2392 = vmatpush1.msra.mxu0 0.0
        %2393 = vmatprep.subr.mxu0 0.0
        %2394 = vmatpush1.msra.mxu0 0.0
        %2395 = vmatprep.subr.mxu0 0.0
        %2396 = vmatpush1.msra.mxu0 0.0
        %2397 = vmatprep.subr.mxu0 0.0
        %2398 = vmatpush1.msra.mxu0 0.0
        %2399 = vmatprep.subr.mxu0 0.0
        %2400 = vmatpush1.msra.mxu0 0.0
        %2401 = vmatprep.subr.mxu0 0.0
        %2402 = vmatpush1.msra.mxu0 0.0
        %2403 = vmatprep.subr.mxu0 0.0
        %2404 = vmatpush1.msra.mxu0 0.0
        %2405 = vmatprep.subr.mxu0 0.0
        %2406 = vmatpush1.msra.mxu0 0.0
        %2407 = vmatprep.subr.mxu0 0.0
        %2408 = vmatpush1.msra.mxu0 0.0
        %2409 = vmatprep.subr.mxu0 0.0
        %2410 = vmatpush1.msra.mxu0 0.0
        %2411 = vmatprep.subr.mxu0 0.0
        %2412 = vmatpush1.msra.mxu0 0.0
        %2413 = vmatprep.subr.mxu0 0.0
        %2414 = vmatpush1.msra.mxu0 0.0
        %2415 = vmatprep.subr.mxu0 0.0
        %2416 = vmatpush1.msra.mxu0 0.0
        %2417 = vmatprep.subr.mxu0 0.0
        %2418 = vmatpush1.msra.mxu0 0.0
        %2419 = vmatprep.subr.mxu0 0.0
        %2420 = vmatpush1.msra.mxu0 0.0
        %2421 = vmatprep.subr.mxu0 0.0
        %2422 = vmatpush1.msra.mxu0 0.0
        %2423 = vmatprep.subr.mxu0 0.0
        %2424 = vmatpush1.msra.mxu0 0.0
        %2425 = vmatprep.subr.mxu0 0.0
        %2426 = vmatpush1.msra.mxu0 0.0
        %2427 = vmatprep.subr.mxu0 0.0
        %2428 = vmatpush1.msra.mxu0 0.0
        %2429 = vmatprep.subr.mxu0 0.0
        %2430 = vmatpush1.msra.mxu0 0.0
        %2431 = vmatprep.subr.mxu0 0.0
        %2432 = vmatpush1.msra.mxu0 0.0
        %2433 = vmatprep.subr.mxu0 0.0
        %2434 = vmatpush1.msra.mxu0 0.0
        %2435 = vmatprep.subr.mxu0 0.0
        %2436 = vmatpush1.msra.mxu0 0.0
        %2437 = vmatprep.subr.mxu0 0.0
        %2438 = vmatpush1.msra.mxu0 0.0
        %2439 = vmatprep.subr.mxu0 0.0
        %2440 = vmatpush1.msra.mxu0 0.0
        %2441 = vmatprep.subr.mxu0 0.0
        %2442 = vmatpush1.msra.mxu0 0.0
        %2443 = vmatprep.subr.mxu0 0.0
        %2444 = vmatpush1.msra.mxu0 0.0
        %2445 = vmatprep.subr.mxu0 0.0
        %2446 = vmatpush1.msra.mxu0 0.0
        %2447 = vmatprep.subr.mxu0 0.0
        %2448 = vmatpush1.msra.mxu0 0.0
        %2449 = vmatprep.subr.mxu0 0.0
        %2450 = vmatpush1.msra.mxu0 0.0
        %2451 = vmatprep.mubr.f32.mxu0 0.0
        %2452 = vmatmul.mubr.f32.gmra.mrb[0].mxu0 %v2340
        %v2453 = vpop.f32.mrb[0].mxu0
        %v2454 = vadd.f32 %v2261, %v2453
        %v2455 = vpop.f32.mrb[0].mxu0
        %2456 = vmatprep.mubr.f32.mxu0 0.0
        %2457 = vmatmul.mubr.f32.gmra.mrb[0].mxu0 %v2343
        %v2458 = vpop.f32.mrb[0].mxu0
        %v2459 = vadd.f32 %v2266, %v2458
        %v2460 = vpop.f32.mrb[0].mxu0
        %2461 = vmatprep.mubr.f32.mxu0 0.0
        %2462 = vmatmul.mubr.f32.gmra.mrb[0].mxu0 %v2346
        %v2463 = vpop.f32.mrb[0].mxu0
        %v2464 = vadd.f32 %v2271, %v2463
        %v2465 = vpop.f32.mrb[0].mxu0
        %2466 = vmatprep.mubr.f32.mxu0 0.0
        %2467 = vmatmul.mubr.f32.gmra.mrb[0].mxu0 %v2349
        %v2468 = vpop.f32.mrb[0].mxu0
        %v2469 = vadd.f32 %v2276, %v2468
        %v2470 = vpop.f32.mrb[0].mxu0
        %2471 = vmatprep.mubr.f32.mxu0 0.0
        %2472 = vmatmul.mubr.f32.gmra.mrb[0].mxu0 %v2352
        %v2473 = vpop.f32.mrb[0].mxu0
        %v2474 = vadd.f32 %v2281, %v2473
        %v2475 = vpop.f32.mrb[0].mxu0
        %2476 = vmatprep.mubr.f32.mxu0 0.0
        %2477 = vmatmul.mubr.f32.gmra.mrb[0].mxu0 %v2355
        %v2478 = vpop.f32.mrb[0].mxu0
        %v2479 = vadd.f32 %v2286, %v2478
        %v2480 = vpop.f32.mrb[0].mxu0
        %2481 = vmatprep.mubr.f32.mxu0 0.0
        %2482 = vmatmul.mubr.f32.gmra.mrb[0].mxu0 %v2358
        %v2483 = vpop.f32.mrb[0].mxu0
        %v2484 = vadd.f32 %v2291, %v2483
        %v2485 = vpop.f32.mrb[0].mxu0
        %2486 = vmatprep.mubr.f32.mxu0 0.0
        %2487 = vmatmul.mubr.f32.gmra.mrb[0].mxu0 %v2361
        %v2488 = vpop.f32.mrb[0].mxu0
        %v2489 = vadd.f32 %v2296, %v2488
        %v2490 = vpop.f32.mrb[0].mxu0
        %2491 = vmatprep.mubr.f32.mxu0 0.0
        %2492 = vmatmul.mubr.f32.gmra.mrb[0].mxu0 %v2364
        %v2493 = vpop.f32.mrb[0].mxu0
        %v2494 = vadd.f32 %v2301, %v2493
        %v2495 = vpop.f32.mrb[0].mxu0
        %2496 = vmatprep.mubr.f32.mxu0 0.0
        %2497 = vmatmul.mubr.f32.gmra.mrb[0].mxu0 %v2367
        %v2498 = vpop.f32.mrb[0].mxu0
        %v2499 = vadd.f32 %v2306, %v2498
        %v2500 = vpop.f32.mrb[0].mxu0
        %2501 = vmatprep.mubr.f32.mxu0 0.0
        %2502 = vmatmul.mubr.f32.gmra.mrb[0].mxu0 %v2370
        %v2503 = vpop.f32.mrb[0].mxu0
        %v2504 = vadd.f32 %v2311, %v2503
        %v2505 = vpop.f32.mrb[0].mxu0
        %2506 = vmatprep.mubr.f32.mxu0 0.0
        %2507 = vmatmul.mubr.f32.gmra.mrb[0].mxu0 %v2373
        %v2508 = vpop.f32.mrb[0].mxu0
        %v2509 = vadd.f32 %v2316, %v2508
        %v2510 = vpop.f32.mrb[0].mxu0
        %2511 = vmatprep.mubr.f32.mxu0 0.0
        %2512 = vmatmul.mubr.f32.gmra.mrb[0].mxu0 %v2376
        %v2513 = vpop.f32.mrb[0].mxu0
        %v2514 = vadd.f32 %v2321, %v2513
        %v2515 = vpop.f32.mrb[0].mxu0
        %2516 = vmatprep.mubr.f32.mxu0 0.0
        %2517 = vmatmul.mubr.f32.gmra.mrb[0].mxu0 %v2379
        %v2518 = vpop.f32.mrb[0].mxu0
        %v2519 = vadd.f32 %v2326, %v2518
        %v2520 = vpop.f32.mrb[0].mxu0
        %2521 = vmatprep.mubr.f32.mxu0 0.0
        %2522 = vmatmul.mubr.f32.gmra.mrb[0].mxu0 %v2382
        %v2523 = vpop.f32.mrb[0].mxu0
        %v2524 = vadd.f32 %v2331, %v2523
        %v2525 = vpop.f32.mrb[0].mxu0
        %2526 = vmatprep.mubr.f32.mxu0 0.0
        %2527 = vmatmul.mubr.f32.gmra.mrb[0].mxu0 %v2385
        %v2528 = vpop.f32.mrb[0].mxu0
        %v2529 = vadd.f32 %v2336, %v2528
        %v2530 = vpop.f32.mrb[0].mxu0
        %2531 = vdwg.mxu0
        %v2532 = vld [vmem:[%s6] sm:$0x1]
        %v2534 = vlaneseq
        %v2535 = vshrl.u32 %v2534, 7
        %v2536 = vsub.s32 0, %v2535
        %v2537 = vrot.slane %v2532, %v2536
        %v2539 = vadd.f32 %v2454, %v2537
        %v2540 = vadd.f32 %v2459, %v2537
        %v2541 = vadd.f32 %v2464, %v2537
        %v2542 = vadd.f32 %v2469, %v2537
        %v2543 = vadd.f32 %v2474, %v2537
        %v2544 = vadd.f32 %v2479, %v2537
        %v2545 = vadd.f32 %v2484, %v2537
        %v2546 = vadd.f32 %v2489, %v2537
        %v2547 = vadd.f32 %v2494, %v2537
        %v2548 = vadd.f32 %v2499, %v2537
        %v2549 = vadd.f32 %v2504, %v2537
        %v2550 = vadd.f32 %v2509, %v2537
        %v2551 = vadd.f32 %v2514, %v2537
        %v2552 = vadd.f32 %v2519, %v2537
        %v2553 = vadd.f32 %v2524, %v2537
        %v2554 = vadd.f32 %v2529, %v2537
        %v2555 = vmax.f32 %v2539, 0.0
        %v2556 = vmax.f32 %v2540, 0.0
        %v2557 = vmax.f32 %v2541, 0.0
        %v2558 = vmax.f32 %v2542, 0.0
        %v2559 = vmax.f32 %v2543, 0.0
        %v2560 = vmax.f32 %v2544, 0.0
        %v2561 = vmax.f32 %v2545, 0.0
        %v2562 = vmax.f32 %v2546, 0.0
        %v2563 = vmax.f32 %v2547, 0.0
        %v2564 = vmax.f32 %v2548, 0.0
        %v2565 = vmax.f32 %v2549, 0.0
        %v2566 = vmax.f32 %v2550, 0.0
        %v2567 = vmax.f32 %v2551, 0.0
        %v2568 = vmax.f32 %v2552, 0.0
        %v2569 = vmax.f32 %v2553, 0.0
        %v2570 = vmax.f32 %v2554, 0.0
        %v2571 = vld [vmem:[%s7] sm:$0xff]
        %v2572 = vld [vmem:[%s7 + $0x8] sm:$0xff]
        %v2573 = vld [vmem:[%s7 + $0x10] sm:$0xff]
        %v2574 = vld [vmem:[%s7 + $0x18] sm:$0xff]
        %v2575 = vld [vmem:[%s8] sm:$0xff]
        %v2576 = vld [vmem:[%s8 + $0x8] sm:$0xff]
        %v2577 = vld [vmem:[%s8 + $0x10] sm:$0xff]
        %v2578 = vld [vmem:[%s8 + $0x18] sm:$0xff]
        %2580 = vset.pattern.permute.xlu0 0
        %2581 = vperm.xlu0 %2580, %v2575
        %v2582 = vpop.permute.xlu0 %2581
        %2585 = vset.pattern.permute.xlu0 0
        %2586 = vperm.xlu0 %2585, %v2576
        %v2587 = vpop.permute.xlu0 %2586
        %2590 = vset.pattern.permute.xlu0 0
        %2591 = vperm.xlu0 %2590, %v2577
        %v2592 = vpop.permute.xlu0 %2591
        %2595 = vset.pattern.permute.xlu0 0
        %2596 = vperm.xlu0 %2595, %v2578
        %v2597 = vpop.permute.xlu0 %2596
        %vm2599 = vcmask 523264
        %v2601 = vsel %vm2599, %v2571, 0
        %v2604 = vsel %vm2599, %v2572, 0
        %v2607 = vsel %vm2599, %v2573, 0
        %v2610 = vsel %vm2599, %v2574, 0
        %v2613 = vsel %vm2599, %v2555, 0
        %v2616 = vsel %vm2599, %v2556, 0
        %v2619 = vsel %vm2599, %v2557, 0
        %v2622 = vsel %vm2599, %v2558, 0
        %v2625 = vsel %vm2599, %v2559, 0
        %v2628 = vsel %vm2599, %v2560, 0
        %v2631 = vsel %vm2599, %v2561, 0
        %v2634 = vsel %vm2599, %v2562, 0
        %v2637 = vsel %vm2599, %v2563, 0
        %v2640 = vsel %vm2599, %v2564, 0
        %v2643 = vsel %vm2599, %v2565, 0
        %v2646 = vsel %vm2599, %v2566, 0
        %v2649 = vsel %vm2599, %v2567, 0
        %v2652 = vsel %vm2599, %v2568, 0
        %v2655 = vsel %vm2599, %v2569, 0
        %v2658 = vsel %vm2599, %v2570, 0
        %2660 = vmatprep.subr.mxu0 0.0
        %2661 = vmatpush1.xpose.msra.mxu0 %v2613
        %2662 = vmatprep.subr.mxu0 0.0
        %2663 = vmatpush1.xpose.msra.mxu0 %v2616
        %2664 = vmatprep.subr.mxu0 0.0
        %2665 = vmatpush1.xpose.msra.mxu0 %v2619
        %2666 = vmatprep.subr.mxu0 0.0
        %2667 = vmatpush1.xpose.msra.mxu0 %v2622
        %2668 = vmatprep.subr.mxu0 0.0
        %2669 = vmatpush1.xpose.msra.mxu0 %v2625
        %2670 = vmatprep.subr.mxu0 0.0
        %2671 = vmatpush1.xpose.msra.mxu0 %v2628
        %2672 = vmatprep.subr.mxu0 0.0
        %2673 = vmatpush1.xpose.msra.mxu0 %v2631
        %2674 = vmatprep.subr.mxu0 0.0
        %2675 = vmatpush1.xpose.msra.mxu0 %v2634
        %2676 = vmatprep.subr.mxu0 0.0
        %2677 = vmatpush1.xpose.msra.mxu0 %v2637
        %2678 = vmatprep.subr.mxu0 0.0
        %2679 = vmatpush1.xpose.msra.mxu0 %v2640
        %2680 = vmatprep.subr.mxu0 0.0
        %2681 = vmatpush1.xpose.msra.mxu0 %v2643
        %2682 = vmatprep.subr.mxu0 0.0
        %2683 = vmatpush1.xpose.msra.mxu0 %v2646
        %2684 = vmatprep.subr.mxu0 0.0
        %2685 = vmatpush1.xpose.msra.mxu0 %v2649
        %2686 = vmatprep.subr.mxu0 0.0
        %2687 = vmatpush1.xpose.msra.mxu0 %v2652
        %2688 = vmatprep.subr.mxu0 0.0
        %2689 = vmatpush1.xpose.msra.mxu0 %v2655
        %2690 = vmatprep.subr.mxu0 0.0
        %2691 = vmatpush1.xpose.msra.mxu0 %v2658
        %2692 = vmatprep.subr.mxu0 0.0
        %2693 = vmatpush1.xpose.msra.mxu0 0.0
        %2694 = vmatprep.subr.mxu0 0.0
        %2695 = vmatpush1.xpose.msra.mxu0 0.0
        %2696 = vmatprep.subr.mxu0 0.0
        %2697 = vmatpush1.xpose.msra.mxu0 0.0
        %2698 = vmatprep.subr.mxu0 0.0
        %2699 = vmatpush1.xpose.msra.mxu0 0.0
        %2700 = vmatprep.subr.mxu0 0.0
        %2701 = vmatpush1.xpose.msra.mxu0 0.0
        %2702 = vmatprep.subr.mxu0 0.0
        %2703 = vmatpush1.xpose.msra.mxu0 0.0
        %2704 = vmatprep.subr.mxu0 0.0
        %2705 = vmatpush1.xpose.msra.mxu0 0.0
        %2706 = vmatprep.subr.mxu0 0.0
        %2707 = vmatpush1.xpose.msra.mxu0 0.0
        %2708 = vmatprep.subr.mxu0 0.0
        %2709 = vmatpush1.xpose.msra.mxu0 0.0
        %2710 = vmatprep.subr.mxu0 0.0
        %2711 = vmatpush1.xpose.msra.mxu0 0.0
        %2712 = vmatprep.subr.mxu0 0.0
        %2713 = vmatpush1.xpose.msra.mxu0 0.0
        %2714 = vmatprep.subr.mxu0 0.0
        %2715 = vmatpush1.xpose.msra.mxu0 0.0
        %2716 = vmatprep.subr.mxu0 0.0
        %2717 = vmatpush1.xpose.msra.mxu0 0.0
        %2718 = vmatprep.subr.mxu0 0.0
        %2719 = vmatpush1.xpose.msra.mxu0 0.0
        %2720 = vmatprep.subr.mxu0 0.0
        %2721 = vmatpush1.xpose.msra.mxu0 0.0
        %2722 = vmatprep.subr.mxu0 0.0
        %2723 = vmatpush1.xpose.msra.mxu0 0.0
        %2724 = vmatprep.mubr.f32.mxu0 0.0
        %2725 = vmatmul.mubr.f32.gmra.mrb[0].mxu0 %v2601
        %v2726 = vpop.f32.mrb[0].mxu0
        %v2727 = vadd.f32 %v2582, %v2726
        %v2728 = vpop.f32.mrb[0].mxu0
        %2729 = vmatprep.mubr.f32.mxu0 0.0
        %2730 = vmatmul.mubr.f32.gmra.mrb[0].mxu0 %v2604
        %v2731 = vpop.f32.mrb[0].mxu0
        %v2732 = vadd.f32 %v2587, %v2731
        %v2733 = vpop.f32.mrb[0].mxu0
        %2734 = vmatprep.mubr.f32.mxu0 0.0
        %2735 = vmatmul.mubr.f32.gmra.mrb[0].mxu0 %v2607
        %v2736 = vpop.f32.mrb[0].mxu0
        %v2737 = vadd.f32 %v2592, %v2736
        %v2738 = vpop.f32.mrb[0].mxu0
        %2739 = vmatprep.mubr.f32.mxu0 0.0
        %2740 = vmatmul.mubr.f32.gmra.mrb[0].mxu0 %v2610
        %v2741 = vpop.f32.mrb[0].mxu0
        %v2742 = vadd.f32 %v2597, %v2741
        %v2743 = vpop.f32.mrb[0].mxu0
        %2744 = vdwg.mxu0
        %v2745 = vmax.f32 %v2727, 0.0
        %v2746 = vmax.f32 %v2732, 0.0
        %v2747 = vmax.f32 %v2737, 0.0
        %v2748 = vmax.f32 %v2742, 0.0
        %2749 = vst [vmem:[%s404] sm:$0xff] %v2745
        %2750 = vst [vmem:[%s404 + $0x8] sm:$0xff] %v2746
        %2751 = vst [vmem:[%s404 + $0x10] sm:$0xff] %v2747
        %2752 = vst [vmem:[%s404 + $0x18] sm:$0xff] %v2748
        %s2753 = sand.u32 %s258, 1
        %s2754 = scalar_lea.sflag [#allocation3], %s2753
        %s2755 = sand.u32 %s258, 1
        %s2756 = smul.addr %s2755, 32
        %s2757 = scalar_lea.vmem [#allocation2], %s2756
        // Predicated region
        $region57: #{pointnet_fp_forward.1} parent=55 // pred_check
          %p2758 = pneg %p268
        $region58: #{pointnet_fp_forward.1} parent=55 // pred_check_branch
          %2760 = sbr.rel (%p2758) target = $region60
        $region59: #{pointnet_fp_forward.1} parent=55 // pred_region
          %s2762 = ssub.s32 512, 512
          %2763 = vsyncadd %s2754, %s2762
          %s2764 = smul.addr %s27, 4
          %s2765 = sadd.s32 %s28, %s2764
          %s2766 = smul.addr %s2765, 128
          %s2767 = scalar_lea.hbm %s9, %s2766
          %s2768 = sshll.u32 %s2757, 4
          %s2769 = int_to_ptr.vmem [resolvable:$true] %s2768
          %2774 = dma.vmem_to_hbm [thread:$0]  %s2769, 512, %s2767, %s2754, 128, 128, 8
        $region60: #{pointnet_fp_forward.1} parent=55 // pred_fallthru
          _
      $region56: #{pointnet_fp_forward.1} parent=5 // pred_fallthru
        _
      %p2775 = scmp.le.s32.totalorder 2, %s18
      // Predicated region
      $region61: #{pointnet_fp_forward.1} parent=5 // pred_check
        %p2776 = pneg %p2775
      $region62: #{pointnet_fp_forward.1} parent=5 // pred_check_branch
        %2778 = sbr.rel (%p2776) target = $region64
      $region63: #{pointnet_fp_forward.1} parent=5 // pred_region
        %s2779 = ssub.s32 %s18, 2
        // Predicated region
        $region65: #{pointnet_fp_forward.1} parent=63 // pred_check
          %p2780 = pneg %p274
        $region66: #{pointnet_fp_forward.1} parent=63 // pred_check_branch
          %2782 = sbr.rel (%p2780) target = $region68
        $region67: #{pointnet_fp_forward.1} parent=63 // pred_region
          %s2783 = sand.u32 %s259, 1
          %s2784 = scalar_lea.sflag [#allocation3], %s2783
          %s2785 = sand.u32 %s259, 1
          %s2786 = smul.addr %s2785, 32
          %s2787 = scalar_lea.vmem [#allocation2], %s2786
          %2788 = dma.done %s2784, 512
        $region68: #{pointnet_fp_forward.1} parent=63 // pred_fallthru
          _
      $region64: #{pointnet_fp_forward.1} parent=5 // pred_fallthru
        _
    $region6: #{pointnet_fp_forward.1} parent=1 // loop_footer
      %s22 = sadd.s32 1, %s18
    $region7: #{pointnet_fp_forward.1} parent=1 // loop_footer_branch
      %17 = sbr.rel target = $region3
    $region8: #{pointnet_fp_forward.1} parent=1 // loop_exit
      _
    %2789 = vsyncpa [#allocation3], 1
    %s2790 = scalar_lea.sflag [#allocation3], 1
    %2791 = vsyncpa %s2790, 1

</llo_original>
